<compile_context>
chip_gen: v7x
topology: tpu7x:2x2x1
jax: 0.10.0
libtpu: 0.0.40
codegen_flags: <defaults>
</compile_context>

<pallas_src>
import functools
import numpy as np
import jax
import jax.numpy as jnp
from jax import lax
from jax.experimental import pallas as pl
from jax.experimental.pallas import tpu as pltpu

HP = lax.Precision.HIGHEST          # reference / fallback path only
BF16 = jnp.bfloat16

# MXU-friendly tile targets (multiples of (8,128)).  512-tiles sit at ~85% of the
# measured HBM roofline; the f32 double-buffered working set (~7 MiB) fits the v5e
# 16 MiB scoped default and v6e/v7x 32 MiB defaults.
TM, TN, TK = 512, 512, 256
VMEM_LIMIT = 32 * 1024 * 1024       # explicit scoped-VMEM budget (safe on v5e..v7x)


def _pick_tile(dim, target):
    """`target` if it divides `dim`, else the full dim (full dims always satisfy the
    (8,128) block constraint)."""
    return target if dim % target == 0 else dim


def _pick_group(t):
    """Gather-batch size for the embedding gather (sublane-dense, divides t)."""
    for g in (32, 16, 8):
        if t % g == 0:
            return g
    return t


# ---------------------------------------------------------------------------
# Pallas kernels
# ---------------------------------------------------------------------------
def _embed_gather_kernel(ids_ref, tab_ref, o_ref, buf, sem, *, scale, gsz):
    # ids live in SMEM (scalar prefetch); the table stays in HBM (pl.ANY).  Each grid
    # step gathers `gsz` rows with manual row DMAs into a VMEM scratch, then applies the
    # AdaptiveEmbedding emb_scale and writes a sublane-dense (gsz, d) output block.
    base = pl.program_id(0) * gsz
    for g in range(gsz):
        pltpu.make_async_copy(tab_ref.at[pl.ds(ids_ref[base + g], 1)],
                              buf.at[pl.ds(g, 1)], sem.at[g]).start()
    for g in range(gsz):
        pltpu.make_async_copy(tab_ref.at[pl.ds(ids_ref[base + g], 1)],
                              buf.at[pl.ds(g, 1)], sem.at[g]).wait()
    o_ref[...] = buf[...] * scale


def _pos_emb_kernel(pos_ref, invf_ref, o_ref, *, half):
    # sinusoid = outer(pos_seq, inv_freq); out = [sin | cos] along the last dim
    s = pos_ref[...] * invf_ref[...]                      # (klen, d_model)
    col = lax.broadcasted_iota(jnp.int32, s.shape, 1)
    o_ref[...] = jnp.where(col < half, jnp.sin(s), jnp.cos(s))


def _matmul_kernel(x_ref, w_ref, o_ref, acc_ref):
    # tiled matmul; bf16 MXU feeds, f32 VMEM accumulator, flush only on the last K step
    @pl.when(pl.program_id(2) == 0)
    def _():
        acc_ref[...] = jnp.zeros_like(acc_ref)

    acc_ref[...] += jnp.dot(x_ref[...].astype(BF16), w_ref[...].astype(BF16),
                            preferred_element_type=jnp.float32)

    @pl.when(pl.program_id(2) == pl.num_programs(2) - 1)
    def _():
        o_ref[...] = acc_ref[...].astype(o_ref.dtype)


def _rel_attn_fused_kernel(q_ref, k_ref, v_ref, r_ref, rwb_ref, rrb_ref, o_ref, *,
                           scale, shift, diag):
    # one (batch, head) program: AC = (q+r_w_bias)k^T, BD = (q+r_r_bias)r^T, in-kernel
    # Transformer-XL rel-shift via a per-row strided lane rotation, causal mask, online
    # softmax with deferred normalization (divide after P@V via the EUP reciprocal).
    # NOTE(v6e/v7x): each dot here is d_head(=128)-deep -> half-fills the 2x256^2 MXU;
    # on v5e (4x128^2) the shapes map perfectly.  Batching heads in one program would
    # trade this back against VMEM/vreg pressure and megacore fan-out.
    qlen = q_ref.shape[1]
    klen = k_ref.shape[1]
    q = q_ref[0]                                          # (qlen, d_head) f32
    k = k_ref[0].astype(BF16)
    v = v_ref[0].astype(BF16)
    r = r_ref[...].astype(BF16)
    rw_q = (q + rwb_ref[...]).astype(BF16)
    rr_q = (q + rrb_ref[...]).astype(BF16)
    dn = (((1,), (1,)), ((), ()))                         # contract last dims -> (q, k)
    ac = lax.dot_general(rw_q, k, dn, preferred_element_type=jnp.float32)
    bd = lax.dot_general(rr_q, r, dn, preferred_element_type=jnp.float32)
    # _rel_shift: row i needs BD[i, qlen-1-i+j].  Row i is rotated by (shift + i);
    # the circular wrap only lands in masked positions for ext_ds==0 / mem_len==0
    # (this config) -- general ext_ds uses the fallback path below.
    bd = pltpu.roll(bd, shift, 1, stride=1, stride_axis=0)
    s = (ac + bd) * scale
    row = lax.broadcasted_iota(jnp.int32, (qlen, klen), 0)
    col = lax.broadcasted_iota(jnp.int32, (qlen, klen), 1)
    s = jnp.where(col >= row + diag, -jnp.inf, s)         # triu(1 + mlen + ext_ds)
    m = jnp.max(s, axis=-1, keepdims=True)
    e = jnp.exp(s - m)
    l = jnp.sum(e, axis=-1, keepdims=True)
    acc = jnp.dot(e.astype(BF16), v, preferred_element_type=jnp.float32)
    o_ref[0] = acc * pl.reciprocal(l, approx=True)


# -- fallback attention path (used only if the strided-rotation rel-shift is not
#    available / behaves differently on this backend; exact torch _rel_shift in JAX) --
def _attn_scores_b_kernel(qkv_ref, r_ref, rwb_ref, rrb_ref, ac_ref, bd_ref, *,
                          n_head, d_head):
    hd = n_head * d_head
    dn = (((1,), (1,)), ((), ()))
    for h in range(n_head):
        lo, hi = h * d_head, (h + 1) * d_head
        q = qkv_ref[0, :, lo:hi]
        k = qkv_ref[0, :, hd + lo:hd + hi]
        r = r_ref[:, lo:hi]
        ac_ref[0, h] = lax.dot_general(q + rwb_ref[:, lo:hi], k, dn, precision=HP,
                                       preferred_element_type=jnp.float32)
        bd_ref[0, h] = lax.dot_general(q + rrb_ref[:, lo:hi], r, dn, precision=HP,
                                       preferred_element_type=jnp.float32)


def _attn_core_b_kernel(ac_ref, bd_ref, qkv_ref, o_ref, *, n_head, d_head, scale, diag):
    hd = n_head * d_head
    qlen, klen = ac_ref.shape[2], ac_ref.shape[3]
    row = lax.broadcasted_iota(jnp.int32, (qlen, klen), 0)
    col = lax.broadcasted_iota(jnp.int32, (qlen, klen), 1)
    masked = col >= row + diag
    outs = []
    for h in range(n_head):
        s = (ac_ref[0, h] + bd_ref[0, h]) * scale
        s = jnp.where(masked, -jnp.inf, s)
        m = jnp.max(s, axis=-1, keepdims=True)
        e = jnp.exp(s - m)
        p = e / jnp.sum(e, axis=-1, keepdims=True)
        v = qkv_ref[0, :, 2 * hd + h * d_head:2 * hd + (h + 1) * d_head]
        outs.append(jnp.dot(p, v, precision=HP, preferred_element_type=jnp.float32))
    o_ref[0] = jnp.concatenate(outs, axis=-1)


def _attnout_ln_kernel(av_ref, wo_ref, res_ref, g_ref, b_ref, o_ref, acc_ref, *, eps):
    # o_net matmul (bf16 MXU feeds) with fused residual add + LayerNorm epilogue
    k = pl.program_id(1)

    @pl.when(k == 0)
    def _():
        acc_ref[...] = jnp.zeros_like(acc_ref)

    acc_ref[...] += jnp.dot(av_ref[...].astype(BF16), wo_ref[...].astype(BF16),
                            preferred_element_type=jnp.float32)

    @pl.when(k == pl.num_programs(1) - 1)
    def _():
        z = acc_ref[...] + res_ref[...]
        mu = jnp.mean(z, axis=-1, keepdims=True)
        d = z - mu
        var = jnp.mean(d * d, axis=-1, keepdims=True)
        o_ref[...] = d * lax.rsqrt(var + eps) * g_ref[...] + b_ref[...]


def _head_loss_kernel(x_ref, w_ref, b_ref, tgt_ref, loss_ref, prob_ref, acc_ref):
    # fused output head: logits stay in VMEM; log-softmax + NLL loss + softmax probs
    # in one kernel; targets compared against an in-kernel iota via a select (no float
    # one-hot), probability divide on the EUP reciprocal.
    k = pl.program_id(1)

    @pl.when(k == 0)
    def _():
        acc_ref[...] = jnp.zeros_like(acc_ref)

    acc_ref[...] += jnp.dot(x_ref[...].astype(BF16), w_ref[...].astype(BF16),
                            preferred_element_type=jnp.float32)

    @pl.when(k == pl.num_programs(1) - 1)
    def _():
        logit = acc_ref[...] + b_ref[...]
        m = jnp.max(logit, axis=-1, keepdims=True)
        z = logit - m
        e = jnp.exp(z)
        se = jnp.sum(e, axis=-1, keepdims=True)
        logp = z - jnp.log(se)
        col = lax.broadcasted_iota(jnp.int32, logp.shape, 1)
        loss_ref[...] = -jnp.sum(jnp.where(col == tgt_ref[...], logp, 0.0),
                                 axis=-1, keepdims=True)
        prob_ref[...] = e * pl.reciprocal(se, approx=True)


# ---------------------------------------------------------------------------
# pallas_call wrappers
# ---------------------------------------------------------------------------
def pallas_embed_gather(ids, emb_table, scale):
    (t,) = ids.shape
    v, d = emb_table.shape
    gsz = _pick_group(t)
    return pl.pallas_call(
        functools.partial(_embed_gather_kernel, scale=scale, gsz=gsz),
        grid_spec=pltpu.PrefetchScalarGridSpec(
            num_scalar_prefetch=1,
            grid=(t // gsz,),
            in_specs=[pl.BlockSpec(memory_space=pl.ANY)],      # table stays in HBM
            out_specs=pl.BlockSpec((gsz, d), lambda i, ids_ref: (i, 0)),
            scratch_shapes=[pltpu.VMEM((gsz, d), jnp.float32),
                            pltpu.SemaphoreType.DMA((gsz,))]),
        out_shape=jax.ShapeDtypeStruct((t, d), jnp.float32),
        compiler_params=pltpu.CompilerParams(dimension_semantics=("parallel",)),
    )(ids, emb_table)


def pallas_pos_emb(klen, d_model):
    half = d_model // 2
    pos_seq = jnp.arange(klen - 1, -1, -1, dtype=jnp.float32).reshape(klen, 1)
    inv_freq = 1.0 / (10000.0 ** (jnp.arange(0, d_model, 2, dtype=jnp.float32) / d_model))
    invf_full = jnp.concatenate([inv_freq, inv_freq]).reshape(1, d_model)
    return pl.pallas_call(
        functools.partial(_pos_emb_kernel, half=half),
        out_shape=jax.ShapeDtypeStruct((klen, d_model), jnp.float32),
    )(pos_seq, invf_full)


def pallas_matmul(x, w):
    m, kd = x.shape
    _, n = w.shape
    tm, tn, tk = _pick_tile(m, TM), _pick_tile(n, TN), _pick_tile(kd, TK)
    return pl.pallas_call(
        _matmul_kernel,
        grid_spec=pltpu.PrefetchScalarGridSpec(
            num_scalar_prefetch=0,
            grid=(m // tm, n // tn, kd // tk),
            in_specs=[pl.BlockSpec((tm, tk), lambda i, j, k: (i, k)),
                      pl.BlockSpec((tk, tn), lambda i, j, k: (k, j))],
            out_specs=pl.BlockSpec((tm, tn), lambda i, j, k: (i, j)),
            scratch_shapes=[pltpu.VMEM((tm, tn), jnp.float32)]),
        out_shape=jax.ShapeDtypeStruct((m, n), jnp.float32),
        compiler_params=pltpu.CompilerParams(
            dimension_semantics=("parallel", "parallel", "arbitrary"),
            vmem_limit_bytes=VMEM_LIMIT),
    )(x, w)


def pallas_rel_attention(qkv_b, r_head, rwb2d, rrb2d, *, n_head, d_head, scale, shift, diag):
    b, qlen, _ = qkv_b.shape
    klen, hd = r_head.shape
    kern = functools.partial(_rel_attn_fused_kernel, scale=scale, shift=shift, diag=diag)
    return pl.pallas_call(
        kern,
        grid=(b, n_head),
        in_specs=[pl.BlockSpec((1, qlen, d_head), lambda bi, h: (bi, 0, h)),
                  pl.BlockSpec((1, qlen, d_head), lambda bi, h: (bi, 0, n_head + h)),
                  pl.BlockSpec((1, qlen, d_head), lambda bi, h: (bi, 0, 2 * n_head + h)),
                  pl.BlockSpec((klen, d_head), lambda bi, h: (0, h)),
                  pl.BlockSpec((1, d_head), lambda bi, h: (0, h)),
                  pl.BlockSpec((1, d_head), lambda bi, h: (0, h))],
        out_specs=pl.BlockSpec((1, qlen, d_head), lambda bi, h: (bi, 0, h)),
        out_shape=jax.ShapeDtypeStruct((b, qlen, hd), jnp.float32),
        compiler_params=pltpu.CompilerParams(
            dimension_semantics=("parallel", "parallel"),
            vmem_limit_bytes=VMEM_LIMIT),
    )(qkv_b, qkv_b, qkv_b, r_head, rwb2d, rrb2d)


def pallas_attn_scores_b(qkv_b, r_head, rwb2d, rrb2d, n_head, d_head):
    b, qlen, threehd = qkv_b.shape
    klen, hd = r_head.shape
    kern = functools.partial(_attn_scores_b_kernel, n_head=n_head, d_head=d_head)
    spec_s = pl.BlockSpec((1, n_head, qlen, klen), lambda bi: (bi, 0, 0, 0))
    return pl.pallas_call(
        kern,
        grid=(b,),
        in_specs=[pl.BlockSpec((1, qlen, threehd), lambda bi: (bi, 0, 0)),
                  pl.BlockSpec((klen, hd), lambda bi: (0, 0)),
                  pl.BlockSpec((1, hd), lambda bi: (0, 0)),
                  pl.BlockSpec((1, hd), lambda bi: (0, 0))],
        out_specs=(spec_s, spec_s),
        out_shape=(jax.ShapeDtypeStruct((b, n_head, qlen, klen), jnp.float32),
                   jax.ShapeDtypeStruct((b, n_head, qlen, klen), jnp.float32)),
        compiler_params=pltpu.CompilerParams(dimension_semantics=("parallel",)),
    )(qkv_b, r_head, rwb2d, rrb2d)


def pallas_attn_core_b(ac, bd_shift, qkv_b, n_head, d_head, scale, diag):
    b, h, qlen, klen = ac.shape
    threehd = qkv_b.shape[-1]
    hd = n_head * d_head
    kern = functools.partial(_attn_core_b_kernel, n_head=n_head, d_head=d_head,
                             scale=scale, diag=diag)
    spec_s = pl.BlockSpec((1, h, qlen, klen), lambda bi: (bi, 0, 0, 0))
    return pl.pallas_call(
        kern,
        grid=(b,),
        in_specs=[spec_s, spec_s,
                  pl.BlockSpec((1, qlen, threehd), lambda bi: (bi, 0, 0))],
        out_specs=pl.BlockSpec((1, qlen, hd), lambda bi: (bi, 0, 0)),
        out_shape=jax.ShapeDtypeStruct((b, qlen, hd), jnp.float32),
        compiler_params=pltpu.CompilerParams(dimension_semantics=("parallel",)),
    )(ac, bd_shift, qkv_b)


def pallas_attnout_layernorm(av, wo, res, g, b, eps=1e-5):
    m, kd = av.shape
    _, d = wo.shape
    tm, tk = _pick_tile(m, TM), _pick_tile(kd, TK)
    return pl.pallas_call(
        functools.partial(_attnout_ln_kernel, eps=eps),
        grid_spec=pltpu.PrefetchScalarGridSpec(
            num_scalar_prefetch=0,
            grid=(m // tm, kd // tk),
            in_specs=[pl.BlockSpec((tm, tk), lambda i, k: (i, k)),
                      pl.BlockSpec((tk, d), lambda i, k: (k, 0)),
                      pl.BlockSpec((tm, d), lambda i, k: (i, 0)),
                      pl.BlockSpec((1, d), lambda i, k: (0, 0)),
                      pl.BlockSpec((1, d), lambda i, k: (0, 0))],
            out_specs=pl.BlockSpec((tm, d), lambda i, k: (i, 0)),
            scratch_shapes=[pltpu.VMEM((tm, d), jnp.float32)]),
        out_shape=jax.ShapeDtypeStruct((m, d), jnp.float32),
        compiler_params=pltpu.CompilerParams(
            dimension_semantics=("parallel", "arbitrary"),
            vmem_limit_bytes=VMEM_LIMIT),
    )(av, wo, res, g, b)


def pallas_head_loss(core, w_out, b_out, tgt_bm):
    m, kd = core.shape
    _, v = w_out.shape
    tm, tk = _pick_tile(m, TM), _pick_tile(kd, TK)
    tgt2d = tgt_bm.reshape(m, 1).astype(jnp.int32)
    loss2d, probs = pl.pallas_call(
        _head_loss_kernel,
        grid_spec=pltpu.PrefetchScalarGridSpec(
            num_scalar_prefetch=0,
            grid=(m // tm, kd // tk),
            in_specs=[pl.BlockSpec((tm, tk), lambda i, k: (i, k)),
                      pl.BlockSpec((tk, v), lambda i, k: (k, 0)),
                      pl.BlockSpec((1, v), lambda i, k: (0, 0)),
                      pl.BlockSpec((tm, 1), lambda i, k: (i, 0))],
            out_specs=(pl.BlockSpec((tm, 1), lambda i, k: (i, 0)),
                       pl.BlockSpec((tm, v), lambda i, k: (i, 0))),
            scratch_shapes=[pltpu.VMEM((tm, v), jnp.float32)]),
        out_shape=(jax.ShapeDtypeStruct((m, 1), jnp.float32),
                   jax.ShapeDtypeStruct((m, v), jnp.float32)),
        compiler_params=pltpu.CompilerParams(
            dimension_semantics=("parallel", "arbitrary"),
            vmem_limit_bytes=VMEM_LIMIT),
    )(core, w_out, b_out, tgt2d)
    return loss2d[:, 0], probs


# ---------------------------------------------------------------------------
# runtime probe for the in-kernel rel-shift (strided lane rotation)
# ---------------------------------------------------------------------------
def strided_roll_matches_rel_shift(qlen, klen, shift):
    """Check that pltpu.roll(x, shift, axis=1, stride=1, stride_axis=0) rotates row i
    by (shift + i) toward higher column indices (np.roll convention).  If not available
    on this backend, the model falls back to the exact torch _rel_shift done in JAX."""
    try:
        def kern(x_ref, o_ref):
            o_ref[...] = pltpu.roll(x_ref[...], shift, 1, stride=1, stride_axis=0)

        x = jnp.broadcast_to(jnp.arange(klen, dtype=jnp.float32), (qlen, klen))
        out = pl.pallas_call(
            kern, out_shape=jax.ShapeDtypeStruct((qlen, klen), jnp.float32))(x)
        out = np.asarray(jax.block_until_ready(out))
        base = np.arange(klen, dtype=np.float32)
        expect = np.stack([np.roll(base, shift + i) for i in range(qlen)])
        return bool(np.array_equal(out, expect))
    except Exception:
        return False


# ---------------------------------------------------------------------------
# Model forward (kernel path)
# ---------------------------------------------------------------------------
def mem_transformer_forward(params, cfg, data, target, use_fused_attn=True):
    qlen, bsz = data.shape
    d_model, n_head, d_head = cfg["d_model"], cfg["n_head"], cfg["d_head"]
    mlen = 0                                    # mem_len = 0 -> no recurrence
    klen = qlen + mlen
    hd = n_head * d_head
    tot = bsz * qlen
    scale = 1.0 / float(d_head) ** 0.5
    diag = 1 + mlen + cfg["ext_ds"]
    shift = (klen - qlen + 1) % klen            # rel-shift base rotation (= mlen + 1)

    # ---- AdaptiveEmbedding: batched manual-DMA row gather fused with * sqrt(d_model) --
    ids_bm = data.transpose(1, 0).reshape(-1).astype(jnp.int32)   # batch-major token ids
    core = pallas_embed_gather(ids_bm, params["emb_table"], float(d_model) ** 0.5)

    # ---- sinusoidal relative position embedding ----
    pos_emb = pallas_pos_emb(klen, d_model)

    rwb2d = params["r_w_bias"].reshape(1, hd)
    rrb2d = params["r_r_bias"].reshape(1, hd)

    for lp in params["layers"]:
        w_heads = pallas_matmul(core, lp["wqkv"])          # (tot, 3*hd)
        r_head = pallas_matmul(pos_emb, lp["wr"])          # (klen, hd)
        qkv_b = w_heads.reshape(bsz, qlen, 3 * hd)         # free view (batch-major slab)

        if use_fused_attn:
            attn_vec_b = pallas_rel_attention(
                qkv_b, r_head, rwb2d, rrb2d, n_head=n_head, d_head=d_head,
                scale=scale, shift=shift, diag=diag)
        else:
            # fallback: un-shifted scores in HBM + exact torch _rel_shift in JAX
            ac, bd = pallas_attn_scores_b(qkv_b, r_head, rwb2d, rrb2d, n_head, d_head)
            zp = jnp.zeros((bsz, n_head, qlen, 1), jnp.float32)
            xp = jnp.concatenate([zp, bd], axis=3).reshape(bsz, n_head, klen + 1, qlen)
            bd_shift = xp[:, :, 1:, :].reshape(bsz, n_head, qlen, klen)
            attn_vec_b = pallas_attn_core_b(ac, bd_shift, qkv_b, n_head, d_head,
                                            scale, diag)

        attn_vec = attn_vec_b.reshape(tot, hd)             # free view
        core = pallas_attnout_layernorm(attn_vec, lp["wo"], core,
                                        lp["ln_g"], lp["ln_b"])

    # ---- output head fused with log-softmax / NLL loss / softmax probabilities ----
    tgt_bm = target.transpose(1, 0).reshape(-1).astype(jnp.int32)
    loss_bm, probs_bm = pallas_head_loss(core, params["w_out"], params["b_out"], tgt_bm)

    # reorder the batch-major results back to the module's time-major flattening
    vocab = probs_bm.shape[-1]
    loss = loss_bm.reshape(bsz, qlen).transpose(1, 0).reshape(-1)
    probs = probs_bm.reshape(bsz, qlen, vocab).transpose(1, 0, 2).reshape(tot, vocab)
    return loss, probs, target.reshape(-1)


# ---------------------------------------------------------------------------
# Pure-JAX f32 reference mirroring the PyTorch math (for correctness check)
# ---------------------------------------------------------------------------
def reference_forward(params, cfg, data, target):
    qlen, bsz = data.shape
    d_model, n_head, d_head = cfg["d_model"], cfg["n_head"], cfg["d_head"]
    klen = qlen
    emb = params["emb_table"][data] * (float(d_model) ** 0.5)      # (q, b, d)
    inv_freq = 1.0 / (10000.0 ** (jnp.arange(0, d_model, 2, dtype=jnp.float32) / d_model))
    pos_seq = jnp.arange(klen - 1, -1, -1, dtype=jnp.float32)
    sinusoid = jnp.outer(pos_seq, inv_freq)
    pos_emb = jnp.concatenate([jnp.sin(sinusoid), jnp.cos(sinusoid)], axis=-1)
    mask = jnp.triu(jnp.ones((qlen, klen), bool), k=1 + cfg["ext_ds"])
    scale = 1.0 / float(d_head) ** 0.5
    core = emb
    for lp in params["layers"]:
        w_heads = jnp.einsum("ibd,de->ibe", core, lp["wqkv"], precision=HP)
        r_head_k = jnp.einsum("kd,de->ke", pos_emb, lp["wr"],
                              precision=HP).reshape(klen, n_head, d_head)
        q_h, k_h, v_h = jnp.split(w_heads, 3, axis=-1)
        q_h = q_h.reshape(qlen, bsz, n_head, d_head)
        k_h = k_h.reshape(klen, bsz, n_head, d_head)
        v_h = v_h.reshape(klen, bsz, n_head, d_head)
        ac = jnp.einsum("ibnd,jbnd->ijbn", q_h + params["r_w_bias"], k_h, precision=HP)
        bd = jnp.einsum("ibnd,jnd->ijbn", q_h + params["r_r_bias"], r_head_k, precision=HP)
        zp = jnp.zeros((qlen, 1, bsz, n_head), bd.dtype)
        xp = jnp.concatenate([zp, bd], axis=1).reshape(klen + 1, qlen, bsz, n_head)
        bd = xp[1:].reshape(qlen, klen, bsz, n_head)
        score = (ac + bd) * scale
        score = jnp.where(mask[:, :, None, None], -jnp.inf, score)
        prob = jax.nn.softmax(score, axis=1)
        attn_vec = jnp.einsum("ijbn,jbnd->ibnd", prob, v_h, precision=HP)
        attn_vec = attn_vec.reshape(qlen, bsz, n_head * d_head)
        attn_out = jnp.einsum("ibe,ed->ibd", attn_vec, lp["wo"], precision=HP)
        z = core + attn_out
        mu = jnp.mean(z, -1, keepdims=True)
        var = jnp.mean((z - mu) ** 2, -1, keepdims=True)
        core = (z - mu) * lax.rsqrt(var + 1e-5) * lp["ln_g"] + lp["ln_b"]
    logit = jnp.einsum("ibd,dv->ibv", core, params["w_out"],
                       precision=HP).reshape(qlen * bsz, -1) + params["b_out"]
    logp = jax.nn.log_softmax(logit, axis=-1)
    tgt = target.reshape(-1)
    loss = -jnp.take_along_axis(logp, tgt[:, None], axis=1)[:, 0]
    return loss, jax.nn.softmax(logit, axis=-1)


# ---------------------------------------------------------------------------
# Deterministic parameter init (shapes from the module __init__)
# ---------------------------------------------------------------------------
def init_params(key, cfg):
    d_model, n_head, d_head = cfg["d_model"], cfg["n_head"], cfg["d_head"]
    n_layer = cfg["n_layer"]
    keys = jax.random.split(key, 6 + 3 * n_layer)

    def nrm(k, shape, s=0.05):
        return s * jax.random.normal(k, shape, jnp.float32)

    params = {
        "emb_table": nrm(keys[0], (cfg["n_token_in"], cfg["d_embed"])),
        "r_w_bias": nrm(keys[1], (n_head, d_head)),
        "r_r_bias": nrm(keys[2], (n_head, d_head)),
        "w_out": nrm(keys[3], (d_model, cfg["n_token_out"])),
        "b_out": nrm(keys[4], (1, cfg["n_token_out"])),
        "layers": [],
    }
    for i in range(n_layer):
        k1, k2, k3 = keys[6 + 3 * i: 9 + 3 * i]
        params["layers"].append({
            "wqkv": nrm(k1, (d_model, 3 * n_head * d_head)),   # qkv_net.weight^T
            "wr": nrm(k2, (d_model, n_head * d_head)),         # r_net.weight^T
            "wo": nrm(k3, (n_head * d_head, d_model)),         # o_net.weight^T
            "ln_g": jnp.ones((1, d_model), jnp.float32),
            "ln_b": jnp.zeros((1, d_model), jnp.float32),
        })
    return params


if __name__ == "__main__":
    # small but lane-aligned config (all block last-dims are >=128 / multiples of 128)
    cfg = dict(n_token_in=256, n_token_out=256, n_layer=2, n_head=2, d_model=256,
               d_head=128, d_embed=256, d_inner=512, ext_ds=0, tgt_len=128, mem_len=0)
    key = jax.random.PRNGKey(0)
    kp, kd, kt = jax.random.split(key, 3)
    params = init_params(kp, cfg)

    qlen, bsz = cfg["tgt_len"], 2
    data = jax.random.randint(kd, (qlen, bsz), 0, cfg["n_token_in"], dtype=jnp.int32)
    target = jax.random.randint(kt, (qlen, bsz), 0, cfg["n_token_out"], dtype=jnp.int32)

    # probe the in-kernel rel-shift primitive; fall back to the two-kernel path if needed
    use_fused = strided_roll_matches_rel_shift(qlen, qlen, 1)

    loss, probs, tgt_flat = mem_transformer_forward(params, cfg, data, target,
                                                    use_fused_attn=use_fused)
    jax.block_until_ready((loss, probs))

    # torch-style return structure: [loss] + [preds] + [targets]  (new_mems is None: mem_len=0)
    result = [loss] + [[np.asarray(probs)]] + [[np.asarray(tgt_flat)]]

    # cross-check against a pure-JAX f32 transcription of the PyTorch math.  The kernels
    # feed the MXU in bf16 (per perf guidance), so tolerances are loosened accordingly.
    ref_loss, ref_probs = reference_forward(params, cfg, data, target)
    np.testing.assert_allclose(np.asarray(loss), np.asarray(ref_loss),
                               rtol=0.1, atol=0.05)
    np.testing.assert_allclose(np.asarray(probs), np.asarray(ref_probs),
                               rtol=0.1, atol=0.01)

    print("KERNEL_OK")
</pallas_src>

<mosaic_0001>
module attributes {stable_mosaic.version = 11 : i64} {
  func.func @kern(%arg0: memref<128x128xf32, #tpu.memory_space<vmem>>, %arg1: memref<128x128xf32, #tpu.memory_space<vmem>>) attributes {dimension_semantics = [], scalar_prefetch = 0 : i64, scratch_operands = 0 : i64, tpu.core_type = #tpu.core_type<tc>} {
    %c0 = arith.constant 0 : index
    %c0_0 = arith.constant 0 : index
    %0 = vector.load %arg0[%c0, %c0_0] : memref<128x128xf32, #tpu.memory_space<vmem>>, vector<128x128xf32>
    %c1_i32 = arith.constant 1 : i32
    %1 = tpu.dynamic_rotate %0 by %c1_i32 dim 1 {stride = 1 : si32, stride_dimension = 0 : si32} : vector<128x128xf32>, i32 -> vector<128x128xf32>
    %c0_1 = arith.constant 0 : index
    %c0_2 = arith.constant 0 : index
    %2 = vector.load %arg1[%c0_1, %c0_2] : memref<128x128xf32, #tpu.memory_space<vmem>>, vector<128x128xf32>
    tpu.vector_store %arg1[%c0_1, %c0_2], %1 {strides = array<i32>} : memref<128x128xf32, #tpu.memory_space<vmem>>, vector<128x128xf32>,
    return
  }
}

module attributes {stable_mosaic.version = 11 : i64} {
  func.func @_embed_gather_kernel(%arg0: i32, %arg1: memref<256xi32, #tpu.memory_space<smem>>, %arg2: memref<256x256xf32, #tpu.memory_space<any>>, %arg3: memref<32x256xf32, #tpu.memory_space<vmem>>, %arg4: memref<32x256xf32, #tpu.memory_space<vmem>>, %arg5: memref<32x!tpu.dma_semaphore, #tpu.memory_space<semaphore_mem>>) attributes {dimension_semantics = [#tpu.dimension_semantics<parallel>], iteration_bounds = array<i64: 8>, scalar_prefetch = 1 : i64, scratch_operands = 2 : i64, tpu.core_type = #tpu.core_type<tc>, window_params = [{}, {transform_indices = @transform_1, window_bounds = array<i64: 32, 256>}]} {
    %c32_i32 = arith.constant 32 : i32
    %0 = arith.muli %arg0, %c32_i32 : i32
    %c0_i32 = arith.constant 0 : i32
    %1 = arith.addi %0, %c0_i32 : i32
    %2 = arith.index_cast %1 : i32 to index
    %3 = memref.load %arg1[%2] : memref<256xi32, #tpu.memory_space<smem>>
    %c0_i32_0 = arith.constant 0 : i32
    %c0_i32_1 = arith.constant 0 : i32
    %4 = tpu.memref_slice %arg2[%3, %c0_i32_1] : memref<256x256xf32, #tpu.memory_space<any>> -> memref<1x256xf32, #tpu.memory_space<any>>
    %c0_i32_2 = arith.constant 0 : i32
    %c0_i32_3 = arith.constant 0 : i32
    %5 = tpu.memref_slice %arg4[%c0_i32_2, %c0_i32_3] : memref<32x256xf32, #tpu.memory_space<vmem>> -> memref<1x256xf32, #tpu.memory_space<vmem>>
    %6 = tpu.memref_slice %arg5[%c0_i32_0] : memref<32x!tpu.dma_semaphore, #tpu.memory_space<semaphore_mem>> -> memref<1x!tpu.dma_semaphore, #tpu.memory_space<semaphore_mem>>
    %7 = tpu.memref_squeeze %6 : memref<1x!tpu.dma_semaphore, #tpu.memory_space<semaphore_mem>> -> memref<!tpu.dma_semaphore, #tpu.memory_space<semaphore_mem>>
    tpu.enqueue_dma source(%4 : memref<1x256xf32, #tpu.memory_space<any>>) target(%5 : memref<1x256xf32, #tpu.memory_space<vmem>>) target_semaphore(%7 : memref<!tpu.dma_semaphore, #tpu.memory_space<semaphore_mem>>)
    %c1_i32 = arith.constant 1 : i32
    %8 = arith.addi %0, %c1_i32 : i32
    %9 = arith.index_cast %8 : i32 to index
    %10 = memref.load %arg1[%9] : memref<256xi32, #tpu.memory_space<smem>>
    %c1_i32_4 = arith.constant 1 : i32
    %c0_i32_5 = arith.constant 0 : i32
    %11 = tpu.memref_slice %arg2[%10, %c0_i32_5] : memref<256x256xf32, #tpu.memory_space<any>> -> memref<1x256xf32, #tpu.memory_space<any>>
    %c1_i32_6 = arith.constant 1 : i32
    %c0_i32_7 = arith.constant 0 : i32
    %12 = tpu.memref_slice %arg4[%c1_i32_6, %c0_i32_7] : memref<32x256xf32, #tpu.memory_space<vmem>> -> memref<1x256xf32, #tpu.memory_space<vmem>>
    %13 = tpu.memref_slice %arg5[%c1_i32_4] : memref<32x!tpu.dma_semaphore, #tpu.memory_space<semaphore_mem>> -> memref<1x!tpu.dma_semaphore, #tpu.memory_space<semaphore_mem>>
    %14 = tpu.memref_squeeze %13 : memref<1x!tpu.dma_semaphore, #tpu.memory_space<semaphore_mem>> -> memref<!tpu.dma_semaphore, #tpu.memory_space<semaphore_mem>>
    tpu.enqueue_dma source(%11 : memref<1x256xf32, #tpu.memory_space<any>>) target(%12 : memref<1x256xf32, #tpu.memory_space<vmem>>) target_semaphore(%14 : memref<!tpu.dma_semaphore, #tpu.memory_space<semaphore_mem>>)
    %c2_i32 = arith.constant 2 : i32
    %15 = arith.addi %0, %c2_i32 : i32
    %16 = arith.index_cast %15 : i32 to index
    %17 = memref.load %arg1[%16] : memref<256xi32, #tpu.memory_space<smem>>
    %c2_i32_8 = arith.constant 2 : i32
    %c0_i32_9 = arith.constant 0 : i32
    %18 = tpu.memref_slice %arg2[%17, %c0_i32_9] : memref<256x256xf32, #tpu.memory_space<any>> -> memref<1x256xf32, #tpu.memory_space<any>>
    %c2_i32_10 = arith.constant 2 : i32
    %c0_i32_11 = arith.constant 0 : i32
    %19 = tpu.memref_slice %arg4[%c2_i32_10, %c0_i32_11] : memref<32x256xf32, #tpu.memory_space<vmem>> -> memref<1x256xf32, #tpu.memory_space<vmem>>
    %20 = tpu.memref_slice %arg5[%c2_i32_8] : memref<32x!tpu.dma_semaphore, #tpu.memory_space<semaphore_mem>> -> memref<1x!tpu.dma_semaphore, #tpu.memory_space<semaphore_mem>>
    %21 = tpu.memref_squeeze %20 : memref<1x!tpu.dma_semaphore, #tpu.memory_space<semaphore_mem>> -> memref<!tpu.dma_semaphore, #tpu.memory_space<semaphore_mem>>
    tpu.enqueue_dma source(%18 : memref<1x256xf32, #tpu.memory_space<any>>) target(%19 : memref<1x256xf32, #tpu.memory_space<vmem>>) target_semaphore(%21 : memref<!tpu.dma_semaphore, #tpu.memory_space<semaphore_mem>>)
    %c3_i32 = arith.constant 3 : i32
    %22 = arith.addi %0, %c3_i32 : i32
    %23 = arith.index_cast %22 : i32 to index
    %24 = memref.load %arg1[%23] : memref<256xi32, #tpu.memory_space<smem>>
    %c3_i32_12 = arith.constant 3 : i32
    %c0_i32_13 = arith.constant 0 : i32
    %25 = tpu.memref_slice %arg2[%24, %c0_i32_13] : memref<256x256xf32, #tpu.memory_space<any>> -> memref<1x256xf32, #tpu.memory_space<any>>
    %c3_i32_14 = arith.constant 3 : i32
    %c0_i32_15 = arith.constant 0 : i32
    %26 = tpu.memref_slice %arg4[%c3_i32_14, %c0_i32_15] : memref<32x256xf32, #tpu.memory_space<vmem>> -> memref<1x256xf32, #tpu.memory_space<vmem>>
    %27 = tpu.memref_slice %arg5[%c3_i32_12] : memref<32x!tpu.dma_semaphore, #tpu.memory_space<semaphore_mem>> -> memref<1x!tpu.dma_semaphore, #tpu.memory_space<semaphore_mem>>
    %28 = tpu.memref_squeeze %27 : memref<1x!tpu.dma_semaphore, #tpu.memory_space<semaphore_mem>> -> memref<!tpu.dma_semaphore, #tpu.memory_space<semaphore_mem>>
    tpu.enqueue_dma source(%25 : memref<1x256xf32, #tpu.memory_space<any>>) target(%26 : memref<1x256xf32, #tpu.memory_space<vmem>>) target_semaphore(%28 : memref<!tpu.dma_semaphore, #tpu.memory_space<semaphore_mem>>)
    %c4_i32 = arith.constant 4 : i32
    %29 = arith.addi %0, %c4_i32 : i32
    %30 = arith.index_cast %29 : i32 to index
    %31 = memref.load %arg1[%30] : memref<256xi32, #tpu.memory_space<smem>>
    %c4_i32_16 = arith.constant 4 : i32
    %c0_i32_17 = arith.constant 0 : i32
    %32 = tpu.memref_slice %arg2[%31, %c0_i32_17] : memref<256x256xf32, #tpu.memory_space<any>> -> memref<1x256xf32, #tpu.memory_space<any>>
    %c4_i32_18 = arith.constant 4 : i32
    %c0_i32_19 = arith.constant 0 : i32
    %33 = tpu.memref_slice %arg4[%c4_i32_18, %c0_i32_19] : memref<32x256xf32, #tpu.memory_space<vmem>> -> memref<1x256xf32, #tpu.memory_space<vmem>>
    %34 = tpu.memref_slice %arg5[%c4_i32_16] : memref<32x!tpu.dma_semaphore, #tpu.memory_space<semaphore_mem>> -> memref<1x!tpu.dma_semaphore, #tpu.memory_space<semaphore_mem>>
    %35 = tpu.memref_squeeze %34 : memref<1x!tpu.dma_semaphore, #tpu.memory_space<semaphore_mem>> -> memref<!tpu.dma_semaphore, #tpu.memory_space<semaphore_mem>>
    tpu.enqueue_dma source(%32 : memref<1x256xf32, #tpu.memory_space<any>>) target(%33 : memref<1x256xf32, #tpu.memory_space<vmem>>) target_semaphore(%35 : memref<!tpu.dma_semaphore, #tpu.memory_space<semaphore_mem>>)
    %c5_i32 = arith.constant 5 : i32
    %36 = arith.addi %0, %c5_i32 : i32
    %37 = arith.index_cast %36 : i32 to index
    %38 = memref.load %arg1[%37] : memref<256xi32, #tpu.memory_space<smem>>
    %c5_i32_20 = arith.constant 5 : i32
    %c0_i32_21 = arith.constant 0 : i32
    %39 = tpu.memref_slice %arg2[%38, %c0_i32_21] : memref<256x256xf32, #tpu.memory_space<any>> -> memref<1x256xf32, #tpu.memory_space<any>>
    %c5_i32_22 = arith.constant 5 : i32
    %c0_i32_23 = arith.constant 0 : i32
    %40 = tpu.memref_slice %arg4[%c5_i32_22, %c0_i32_23] : memref<32x256xf32, #tpu.memory_space<vmem>> -> memref<1x256xf32, #tpu.memory_space<vmem>>
    %41 = tpu.memref_slice %arg5[%c5_i32_20] : memref<32x!tpu.dma_semaphore, #tpu.memory_space<semaphore_mem>> -> memref<1x!tpu.dma_semaphore, #tpu.memory_space<semaphore_mem>>
    %42 = tpu.memref_squeeze %41 : memref<1x!tpu.dma_semaphore, #tpu.memory_space<semaphore_mem>> -> memref<!tpu.dma_semaphore, #tpu.memory_space<semaphore_mem>>
    tpu.enqueue_dma source(%39 : memref<1x256xf32, #tpu.memory_space<any>>) target(%40 : memref<1x256xf32, #tpu.memory_space<vmem>>) target_semaphore(%42 : memref<!tpu.dma_semaphore, #tpu.memory_space<semaphore_mem>>)
    %c6_i32 = arith.constant 6 : i32
    %43 = arith.addi %0, %c6_i32 : i32
    %44 = arith.index_cast %43 : i32 to index
    %45 = memref.load %arg1[%44] : memref<256xi32, #tpu.memory_space<smem>>
    %c6_i32_24 = arith.constant 6 : i32
    %c0_i32_25 = arith.constant 0 : i32
    %46 = tpu.memref_slice %arg2[%45, %c0_i32_25] : memref<256x256xf32, #tpu.memory_space<any>> -> memref<1x256xf32, #tpu.memory_space<any>>
    %c6_i32_26 = arith.constant 6 : i32
    %c0_i32_27 = arith.constant 0 : i32
    %47 = tpu.memref_slice %arg4[%c6_i32_26, %c0_i32_27] : memref<32x256xf32, #tpu.memory_space<vmem>> -> memref<1x256xf32, #tpu.memory_space<vmem>>
    %48 = tpu.memref_slice %arg5[%c6_i32_24] : memref<32x!tpu.dma_semaphore, #tpu.memory_space<semaphore_mem>> -> memref<1x!tpu.dma_semaphore, #tpu.memory_space<semaphore_mem>>
    %49 = tpu.memref_squeeze %48 : memref<1x!tpu.dma_semaphore, #tpu.memory_space<semaphore_mem>> -> memref<!tpu.dma_semaphore, #tpu.memory_space<semaphore_mem>>
    tpu.enqueue_dma source(%46 : memref<1x256xf32, #tpu.memory_space<any>>) target(%47 : memref<1x256xf32, #tpu.memory_space<vmem>>) target_semaphore(%49 : memref<!tpu.dma_semaphore, #tpu.memory_space<semaphore_mem>>)
    %c7_i32 = arith.constant 7 : i32
    %50 = arith.addi %0, %c7_i32 : i32
    %51 = arith.index_cast %50 : i32 to index
    %52 = memref.load %arg1[%51] : memref<256xi32, #tpu.memory_space<smem>>
    %c7_i32_28 = arith.constant 7 : i32
    %c0_i32_29 = arith.constant 0 : i32
    %53 = tpu.memref_slice %arg2[%52, %c0_i32_29] : memref<256x256xf32, #tpu.memory_space<any>> -> memref<1x256xf32, #tpu.memory_space<any>>
    %c7_i32_30 = arith.constant 7 : i32
    %c0_i32_31 = arith.constant 0 : i32
    %54 = tpu.memref_slice %arg4[%c7_i32_30, %c0_i32_31] : memref<32x256xf32, #tpu.memory_space<vmem>> -> memref<1x256xf32, #tpu.memory_space<vmem>>
    %55 = tpu.memref_slice %arg5[%c7_i32_28] : memref<32x!tpu.dma_semaphore, #tpu.memory_space<semaphore_mem>> -> memref<1x!tpu.dma_semaphore, #tpu.memory_space<semaphore_mem>>
    %56 = tpu.memref_squeeze %55 : memref<1x!tpu.dma_semaphore, #tpu.memory_space<semaphore_mem>> -> memref<!tpu.dma_semaphore, #tpu.memory_space<semaphore_mem>>
    tpu.enqueue_dma source(%53 : memref<1x256xf32, #tpu.memory_space<any>>) target(%54 : memref<1x256xf32, #tpu.memory_space<vmem>>) target_semaphore(%56 : memref<!tpu.dma_semaphore, #tpu.memory_space<semaphore_mem>>)
    %c8_i32 = arith.constant 8 : i32
    %57 = arith.addi %0, %c8_i32 : i32
    %58 = arith.index_cast %57 : i32 to index
    %59 = memref.load %arg1[%58] : memref<256xi32, #tpu.memory_space<smem>>
    %c8_i32_32 = arith.constant 8 : i32
    %c0_i32_33 = arith.constant 0 : i32
    %60 = tpu.memref_slice %arg2[%59, %c0_i32_33] : memref<256x256xf32, #tpu.memory_space<any>> -> memref<1x256xf32, #tpu.memory_space<any>>
    %c8_i32_34 = arith.constant 8 : i32
    %c0_i32_35 = arith.constant 0 : i32
    %61 = tpu.memref_slice %arg4[%c8_i32_34, %c0_i32_35] : memref<32x256xf32, #tpu.memory_space<vmem>> -> memref<1x256xf32, #tpu.memory_space<vmem>>
    %62 = tpu.memref_slice %arg5[%c8_i32_32] : memref<32x!tpu.dma_semaphore, #tpu.memory_space<semaphore_mem>> -> memref<1x!tpu.dma_semaphore, #tpu.memory_space<semaphore_mem>>
    %63 = tpu.memref_squeeze %62 : memref<1x!tpu.dma_semaphore, #tpu.memory_space<semaphore_mem>> -> memref<!tpu.dma_semaphore, #tpu.memory_space<semaphore_mem>>
    tpu.enqueue_dma source(%60 : memref<1x256xf32, #tpu.memory_space<any>>) target(%61 : memref<1x256xf32, #tpu.memory_space<vmem>>) target_semaphore(%63 : memref<!tpu.dma_semaphore, #tpu.memory_space<semaphore_mem>>)
    %c9_i32 = arith.constant 9 : i32
    %64 = arith.addi %0, %c9_i32 : i32
    %65 = arith.index_cast %64 : i32 to index
    %66 = memref.load %arg1[%65] : memref<256xi32, #tpu.memory_space<smem>>
    %c9_i32_36 = arith.constant 9 : i32
    %c0_i32_37 = arith.constant 0 : i32
    %67 = tpu.memref_slice %arg2[%66, %c0_i32_37] : memref<256x256xf32, #tpu.memory_space<any>> -> memref<1x256xf32, #tpu.memory_space<any>>
    %c9_i32_38 = arith.constant 9 : i32
    %c0_i32_39 = arith.constant 0 : i32
    %68 = tpu.memref_slice %arg4[%c9_i32_38, %c0_i32_39] : memref<32x256xf32, #tpu.memory_space<vmem>> -> memref<1x256xf32, #tpu.memory_space<vmem>>
    %69 = tpu.memref_slice %arg5[%c9_i32_36] : memref<32x!tpu.dma_semaphore, #tpu.memory_space<semaphore_mem>> -> memref<1x!tpu.dma_semaphore, #tpu.memory_space<semaphore_mem>>
    %70 = tpu.memref_squeeze %69 : memref<1x!tpu.dma_semaphore, #tpu.memory_space<semaphore_mem>> -> memref<!tpu.dma_semaphore, #tpu.memory_space<semaphore_mem>>
    tpu.enqueue_dma source(%67 : memref<1x256xf32, #tpu.memory_space<any>>) target(%68 : memref<1x256xf32, #tpu.memory_space<vmem>>) target_semaphore(%70 : memref<!tpu.dma_semaphore, #tpu.memory_space<semaphore_mem>>)
    %c10_i32 = arith.constant 10 : i32
    %71 = arith.addi %0, %c10_i32 : i32
    %72 = arith.index_cast %71 : i32 to index
    %73 = memref.load %arg1[%72] : memref<256xi32, #tpu.memory_space<smem>>
    %c10_i32_40 = arith.constant 10 : i32
    %c0_i32_41 = arith.constant 0 : i32
    %74 = tpu.memref_slice %arg2[%73, %c0_i32_41] : memref<256x256xf32, #tpu.memory_space<any>> -> memref<1x256xf32, #tpu.memory_space<any>>
    %c10_i32_42 = arith.constant 10 : i32
    %c0_i32_43 = arith.constant 0 : i32
    %75 = tpu.memref_slice %arg4[%c10_i32_42, %c0_i32_43] : memref<32x256xf32, #tpu.memory_space<vmem>> -> memref<1x256xf32, #tpu.memory_space<vmem>>
    %76 = tpu.memref_slice %arg5[%c10_i32_40] : memref<32x!tpu.dma_semaphore, #tpu.memory_space<semaphore_mem>> -> memref<1x!tpu.dma_semaphore, #tpu.memory_space<semaphore_mem>>
    %77 = tpu.memref_squeeze %76 : memref<1x!tpu.dma_semaphore, #tpu.memory_space<semaphore_mem>> -> memref<!tpu.dma_semaphore, #tpu.memory_space<semaphore_mem>>
    tpu.enqueue_dma source(%74 : memref<1x256xf32, #tpu.memory_space<any>>) target(%75 : memref<1x256xf32, #tpu.memory_space<vmem>>) target_semaphore(%77 : memref<!tpu.dma_semaphore, #tpu.memory_space<semaphore_mem>>)
    %c11_i32 = arith.constant 11 : i32
    %78 = arith.addi %0, %c11_i32 : i32
    %79 = arith.index_cast %78 : i32 to index
    %80 = memref.load %arg1[%79] : memref<256xi32, #tpu.memory_space<smem>>
    %c11_i32_44 = arith.constant 11 : i32
    %c0_i32_45 = arith.constant 0 : i32
    %81 = tpu.memref_slice %arg2[%80, %c0_i32_45] : memref<256x256xf32, #tpu.memory_space<any>> -> memref<1x256xf32, #tpu.memory_space<any>>
    %c11_i32_46 = arith.constant 11 : i32
    %c0_i32_47 = arith.constant 0 : i32
    %82 = tpu.memref_slice %arg4[%c11_i32_46, %c0_i32_47] : memref<32x256xf32, #tpu.memory_space<vmem>> -> memref<1x256xf32, #tpu.memory_space<vmem>>
    %83 = tpu.memref_slice %arg5[%c11_i32_44] : memref<32x!tpu.dma_semaphore, #tpu.memory_space<semaphore_mem>> -> memref<1x!tpu.dma_semaphore, #tpu.memory_space<semaphore_mem>>
    %84 = tpu.memref_squeeze %83 : memref<1x!tpu.dma_semaphore, #tpu.memory_space<semaphore_mem>> -> memref<!tpu.dma_semaphore, #tpu.memory_space<semaphore_mem>>
    tpu.enqueue_dma source(%81 : memref<1x256xf32, #tpu.memory_space<any>>) target(%82 : memref<1x256xf32, #tpu.memory_space<vmem>>) target_semaphore(%84 : memref<!tpu.dma_semaphore, #tpu.memory_space<semaphore_mem>>)
    %c12_i32 = arith.constant 12 : i32
    %85 = arith.addi %0, %c12_i32 : i32
    %86 = arith.index_cast %85 : i32 to index
    %87 = memref.load %arg1[%86] : memref<256xi32, #tpu.memory_space<smem>>
    %c12_i32_48 = arith.constant 12 : i32
    %c0_i32_49 = arith.constant 0 : i32
    %88 = tpu.memref_slice %arg2[%87, %c0_i32_49] : memref<256x256xf32, #tpu.memory_space<any>> -> memref<1x256xf32, #tpu.memory_space<any>>
    %c12_i32_50 = arith.constant 12 : i32
    %c0_i32_51 = arith.constant 0 : i32
    %89 = tpu.memref_slice %arg4[%c12_i32_50, %c0_i32_51] : memref<32x256xf32, #tpu.memory_space<vmem>> -> memref<1x256xf32, #tpu.memory_space<vmem>>
    %90 = tpu.memref_slice %arg5[%c12_i32_48] : memref<32x!tpu.dma_semaphore, #tpu.memory_space<semaphore_mem>> -> memref<1x!tpu.dma_semaphore, #tpu.memory_space<semaphore_mem>>
    %91 = tpu.memref_squeeze %90 : memref<1x!tpu.dma_semaphore, #tpu.memory_space<semaphore_mem>> -> memref<!tpu.dma_semaphore, #tpu.memory_space<semaphore_mem>>
    tpu.enqueue_dma source(%88 : memref<1x256xf32, #tpu.memory_space<any>>) target(%89 : memref<1x256xf32, #tpu.memory_space<vmem>>) target_semaphore(%91 : memref<!tpu.dma_semaphore, #tpu.memory_space<semaphore_mem>>)
    %c13_i32 = arith.constant 13 : i32
    %92 = arith.addi %0, %c13_i32 : i32
    %93 = arith.index_cast %92 : i32 to index
    %94 = memref.load %arg1[%93] : memref<256xi32, #tpu.memory_space<smem>>
    %c13_i32_52 = arith.constant 13 : i32
    %c0_i32_53 = arith.constant 0 : i32
    %95 = tpu.memref_slice %arg2[%94, %c0_i32_53] : memref<256x256xf32, #tpu.memory_space<any>> -> memref<1x256xf32, #tpu.memory_space<any>>
    %c13_i32_54 = arith.constant 13 : i32
    %c0_i32_55 = arith.constant 0 : i32
    %96 = tpu.memref_slice %arg4[%c13_i32_54, %c0_i32_55] : memref<32x256xf32, #tpu.memory_space<vmem>> -> memref<1x256xf32, #tpu.memory_space<vmem>>
    %97 = tpu.memref_slice %arg5[%c13_i32_52] : memref<32x!tpu.dma_semaphore, #tpu.memory_space<semaphore_mem>> -> memref<1x!tpu.dma_semaphore, #tpu.memory_space<semaphore_mem>>
    %98 = tpu.memref_squeeze %97 : memref<1x!tpu.dma_semaphore, #tpu.memory_space<semaphore_mem>> -> memref<!tpu.dma_semaphore, #tpu.memory_space<semaphore_mem>>
    tpu.enqueue_dma source(%95 : memref<1x256xf32, #tpu.memory_space<any>>) target(%96 : memref<1x256xf32, #tpu.memory_space<vmem>>) target_semaphore(%98 : memref<!tpu.dma_semaphore, #tpu.memory_space<semaphore_mem>>)
    %c14_i32 = arith.constant 14 : i32
    %99 = arith.addi %0, %c14_i32 : i32
    %100 = arith.index_cast %99 : i32 to index
    %101 = memref.load %arg1[%100] : memref<256xi32, #tpu.memory_space<smem>>
    %c14_i32_56 = arith.constant 14 : i32
    %c0_i32_57 = arith.constant 0 : i32
    %102 = tpu.memref_slice %arg2[%101, %c0_i32_57] : memref<256x256xf32, #tpu.memory_space<any>> -> memref<1x256xf32, #tpu.memory_space<any>>
    %c14_i32_58 = arith.constant 14 : i32
    %c0_i32_59 = arith.constant 0 : i32
    %103 = tpu.memref_slice %arg4[%c14_i32_58, %c0_i32_59] : memref<32x256xf32, #tpu.memory_space<vmem>> -> memref<1x256xf32, #tpu.memory_space<vmem>>
    %104 = tpu.memref_slice %arg5[%c14_i32_56] : memref<32x!tpu.dma_semaphore, #tpu.memory_space<semaphore_mem>> -> memref<1x!tpu.dma_semaphore, #tpu.memory_space<semaphore_mem>>
    %105 = tpu.memref_squeeze %104 : memref<1x!tpu.dma_semaphore, #tpu.memory_space<semaphore_mem>> -> memref<!tpu.dma_semaphore, #tpu.memory_space<semaphore_mem>>
    tpu.enqueue_dma source(%102 : memref<1x256xf32, #tpu.memory_space<any>>) target(%103 : memref<1x256xf32, #tpu.memory_space<vmem>>) target_semaphore(%105 : memref<!tpu.dma_semaphore, #tpu.memory_space<semaphore_mem>>)
    %c15_i32 = arith.constant 15 : i32
    %106 = arith.addi %0, %c15_i32 : i32
    %107 = arith.index_cast %106 : i32 to index
    %108 = memref.load %arg1[%107] : memref<256xi32, #tpu.memory_space<smem>>
    %c15_i32_60 = arith.constant 15 : i32
    %c0_i32_61 = arith.constant 0 : i32
    %109 = tpu.memref_slice %arg2[%108, %c0_i32_61] : memref<256x256xf32, #tpu.memory_space<any>> -> memref<1x256xf32, #tpu.memory_space<any>>
    %c15_i32_62 = arith.constant 15 : i32
    %c0_i32_63 = arith.constant 0 : i32
    %110 = tpu.memref_slice %arg4[%c15_i32_62, %c0_i32_63] : memref<32x256xf32, #tpu.memory_space<vmem>> -> memref<1x256xf32, #tpu.memory_space<vmem>>
    %111 = tpu.memref_slice %arg5[%c15_i32_60] : memref<32x!tpu.dma_semaphore, #tpu.memory_space<semaphore_mem>> -> memref<1x!tpu.dma_semaphore, #tpu.memory_space<semaphore_mem>>
    %112 = tpu.memref_squeeze %111 : memref<1x!tpu.dma_semaphore, #tpu.memory_space<semaphore_mem>> -> memref<!tpu.dma_semaphore, #tpu.memory_space<semaphore_mem>>
    tpu.enqueue_dma source(%109 : memref<1x256xf32, #tpu.memory_space<any>>) target(%110 : memref<1x256xf32, #tpu.memory_space<vmem>>) target_semaphore(%112 : memref<!tpu.dma_semaphore, #tpu.memory_space<semaphore_mem>>)
    %c16_i32 = arith.constant 16 : i32
    %113 = arith.addi %0, %c16_i32 : i32
    %114 = arith.index_cast %113 : i32 to index
    %115 = memref.load %arg1[%114] : memref<256xi32, #tpu.memory_space<smem>>
    %c16_i32_64 = arith.constant 16 : i32
    %c0_i32_65 = arith.constant 0 : i32
    %116 = tpu.memref_slice %arg2[%115, %c0_i32_65] : memref<256x256xf32, #tpu.memory_space<any>> -> memref<1x256xf32, #tpu.memory_space<any>>
    %c16_i32_66 = arith.constant 16 : i32
    %c0_i32_67 = arith.constant 0 : i32
    %117 = tpu.memref_slice %arg4[%c16_i32_66, %c0_i32_67] : memref<32x256xf32, #tpu.memory_space<vmem>> -> memref<1x256xf32, #tpu.memory_space<vmem>>
    %118 = tpu.memref_slice %arg5[%c16_i32_64] : memref<32x!tpu.dma_semaphore, #tpu.memory_space<semaphore_mem>> -> memref<1x!tpu.dma_semaphore, #tpu.memory_space<semaphore_mem>>
    %119 = tpu.memref_squeeze %118 : memref<1x!tpu.dma_semaphore, #tpu.memory_space<semaphore_mem>> -> memref<!tpu.dma_semaphore, #tpu.memory_space<semaphore_mem>>
    tpu.enqueue_dma source(%116 : memref<1x256xf32, #tpu.memory_space<any>>) target(%117 : memref<1x256xf32, #tpu.memory_space<vmem>>) target_semaphore(%119 : memref<!tpu.dma_semaphore, #tpu.memory_space<semaphore_mem>>)
    %c17_i32 = arith.constant 17 : i32
    %120 = arith.addi %0, %c17_i32 : i32
    %121 = arith.index_cast %120 : i32 to index
    %122 = memref.load %arg1[%121] : memref<256xi32, #tpu.memory_space<smem>>
    %c17_i32_68 = arith.constant 17 : i32
    %c0_i32_69 = arith.constant 0 : i32
    %123 = tpu.memref_slice %arg2[%122, %c0_i32_69] : memref<256x256xf32, #tpu.memory_space<any>> -> memref<1x256xf32, #tpu.memory_space<any>>
    %c17_i32_70 = arith.constant 17 : i32
    %c0_i32_71 = arith.constant 0 : i32
    %124 = tpu.memref_slice %arg4[%c17_i32_70, %c0_i32_71] : memref<32x256xf32, #tpu.memory_space<vmem>> -> memref<1x256xf32, #tpu.memory_space<vmem>>
    %125 = tpu.memref_slice %arg5[%c17_i32_68] : memref<32x!tpu.dma_semaphore, #tpu.memory_space<semaphore_mem>> -> memref<1x!tpu.dma_semaphore, #tpu.memory_space<semaphore_mem>>
    %126 = tpu.memref_squeeze %125 : memref<1x!tpu.dma_semaphore, #tpu.memory_space<semaphore_mem>> -> memref<!tpu.dma_semaphore, #tpu.memory_space<semaphore_mem>>
    tpu.enqueue_dma source(%123 : memref<1x256xf32, #tpu.memory_space<any>>) target(%124 : memref<1x256xf32, #tpu.memory_space<vmem>>) target_semaphore(%126 : memref<!tpu.dma_semaphore, #tpu.memory_space<semaphore_mem>>)
    %c18_i32 = arith.constant 18 : i32
    %127 = arith.addi %0, %c18_i32 : i32
    %128 = arith.index_cast %127 : i32 to index
    %129 = memref.load %arg1[%128] : memref<256xi32, #tpu.memory_space<smem>>
    %c18_i32_72 = arith.constant 18 : i32
    %c0_i32_73 = arith.constant 0 : i32
    %130 = tpu.memref_slice %arg2[%129, %c0_i32_73] : memref<256x256xf32, #tpu.memory_space<any>> -> memref<1x256xf32, #tpu.memory_space<any>>
    %c18_i32_74 = arith.constant 18 : i32
    %c0_i32_75 = arith.constant 0 : i32
    %131 = tpu.memref_slice %arg4[%c18_i32_74, %c0_i32_75] : memref<32x256xf32, #tpu.memory_space<vmem>> -> memref<1x256xf32, #tpu.memory_space<vmem>>
    %132 = tpu.memref_slice %arg5[%c18_i32_72] : memref<32x!tpu.dma_semaphore, #tpu.memory_space<semaphore_mem>> -> memref<1x!tpu.dma_semaphore, #tpu.memory_space<semaphore_mem>>
    %133 = tpu.memref_squeeze %132 : memref<1x!tpu.dma_semaphore, #tpu.memory_space<semaphore_mem>> -> memref<!tpu.dma_semaphore, #tpu.memory_space<semaphore_mem>>
    tpu.enqueue_dma source(%130 : memref<1x256xf32, #tpu.memory_space<any>>) target(%131 : memref<1x256xf32, #tpu.memory_space<vmem>>) target_semaphore(%133 : memref<!tpu.dma_semaphore, #tpu.memory_space<semaphore_mem>>)
    %c19_i32 = arith.constant 19 : i32
    %134 = arith.addi %0, %c19_i32 : i32
    %135 = arith.index_cast %134 : i32 to index
    %136 = memref.load %arg1[%135] : memref<256xi32, #tpu.memory_space<smem>>
    %c19_i32_76 = arith.constant 19 : i32
    %c0_i32_77 = arith.constant 0 : i32
    %137 = tpu.memref_slice %arg2[%136, %c0_i32_77] : memref<256x256xf32, #tpu.memory_space<any>> -> memref<1x256xf32, #tpu.memory_space<any>>
    %c19_i32_78 = arith.constant 19 : i32
    %c0_i32_79 = arith.constant 0 : i32
    %138 = tpu.memref_slice %arg4[%c19_i32_78, %c0_i32_79] : memref<32x256xf32, #tpu.memory_space<vmem>> -> memref<1x256xf32, #tpu.memory_space<vmem>>
    %139 = tpu.memref_slice %arg5[%c19_i32_76] : memref<32x!tpu.dma_semaphore, #tpu.memory_space<semaphore_mem>> -> memref<1x!tpu.dma_semaphore, #tpu.memory_space<semaphore_mem>>
    %140 = tpu.memref_squeeze %139 : memref<1x!tpu.dma_semaphore, #tpu.memory_space<semaphore_mem>> -> memref<!tpu.dma_semaphore, #tpu.memory_space<semaphore_mem>>
    tpu.enqueue_dma source(%137 : memref<1x256xf32, #tpu.memory_space<any>>) target(%138 : memref<1x256xf32, #tpu.memory_space<vmem>>) target_semaphore(%140 : memref<!tpu.dma_semaphore, #tpu.memory_space<semaphore_mem>>)
    %c20_i32 = arith.constant 20 : i32
    %141 = arith.addi %0, %c20_i32 : i32
    %142 = arith.index_cast %141 : i32 to index
    %143 = memref.load %arg1[%142] : memref<256xi32, #tpu.memory_space<smem>>
    %c20_i32_80 = arith.constant 20 : i32
    %c0_i32_81 = arith.constant 0 : i32
    %144 = tpu.memref_slice %arg2[%143, %c0_i32_81] : memref<256x256xf32, #tpu.memory_space<any>> -> memref<1x256xf32, #tpu.memory_space<any>>
    %c20_i32_82 = arith.constant 20 : i32
    %c0_i32_83 = arith.constant 0 : i32
    %145 = tpu.memref_slice %arg4[%c20_i32_82, %c0_i32_83] : memref<32x256xf32, #tpu.memory_space<vmem>> -> memref<1x256xf32, #tpu.memory_space<vmem>>
    %146 = tpu.memref_slice %arg5[%c20_i32_80] : memref<32x!tpu.dma_semaphore, #tpu.memory_space<semaphore_mem>> -> memref<1x!tpu.dma_semaphore, #tpu.memory_space<semaphore_mem>>
    %147 = tpu.memref_squeeze %146 : memref<1x!tpu.dma_semaphore, #tpu.memory_space<semaphore_mem>> -> memref<!tpu.dma_semaphore, #tpu.memory_space<semaphore_mem>>
    tpu.enqueue_dma source(%144 : memref<1x256xf32, #tpu.memory_space<any>>) target(%145 : memref<1x256xf32, #tpu.memory_space<vmem>>) target_semaphore(%147 : memref<!tpu.dma_semaphore, #tpu.memory_space<semaphore_mem>>)
    %c21_i32 = arith.constant 21 : i32
    %148 = arith.addi %0, %c21_i32 : i32
    %149 = arith.index_cast %148 : i32 to index
    %150 = memref.load %arg1[%149] : memref<256xi32, #tpu.memory_space<smem>>
    %c21_i32_84 = arith.constant 21 : i32
    %c0_i32_85 = arith.constant 0 : i32
    %151 = tpu.memref_slice %arg2[%150, %c0_i32_85] : memref<256x256xf32, #tpu.memory_space<any>> -> memref<1x256xf32, #tpu.memory_space<any>>
    %c21_i32_86 = arith.constant 21 : i32
    %c0_i32_87 = arith.constant 0 : i32
    %152 = tpu.memref_slice %arg4[%c21_i32_86, %c0_i32_87] : memref<32x256xf32, #tpu.memory_space<vmem>> -> memref<1x256xf32, #tpu.memory_space<vmem>>
    %153 = tpu.memref_slice %arg5[%c21_i32_84] : memref<32x!tpu.dma_semaphore, #tpu.memory_space<semaphore_mem>> -> memref<1x!tpu.dma_semaphore, #tpu.memory_space<semaphore_mem>>
    %154 = tpu.memref_squeeze %153 : memref<1x!tpu.dma_semaphore, #tpu.memory_space<semaphore_mem>> -> memref<!tpu.dma_semaphore, #tpu.memory_space<semaphore_mem>>
    tpu.enqueue_dma source(%151 : memref<1x256xf32, #tpu.memory_space<any>>) target(%152 : memref<1x256xf32, #tpu.memory_space<vmem>>) target_semaphore(%154 : memref<!tpu.dma_semaphore, #tpu.memory_space<semaphore_mem>>)
    %c22_i32 = arith.constant 22 : i32
    %155 = arith.addi %0, %c22_i32 : i32
    %156 = arith.index_cast %155 : i32 to index
    %157 = memref.load %arg1[%156] : memref<256xi32, #tpu.memory_space<smem>>
    %c22_i32_88 = arith.constant 22 : i32
    %c0_i32_89 = arith.constant 0 : i32
    %158 = tpu.memref_slice %arg2[%157, %c0_i32_89] : memref<256x256xf32, #tpu.memory_space<any>> -> memref<1x256xf32, #tpu.memory_space<any>>
    %c22_i32_90 = arith.constant 22 : i32
    %c0_i32_91 = arith.constant 0 : i32
    %159 = tpu.memref_slice %arg4[%c22_i32_90, %c0_i32_91] : memref<32x256xf32, #tpu.memory_space<vmem>> -> memref<1x256xf32, #tpu.memory_space<vmem>>
    %160 = tpu.memref_slice %arg5[%c22_i32_88] : memref<32x!tpu.dma_semaphore, #tpu.memory_space<semaphore_mem>> -> memref<1x!tpu.dma_semaphore, #tpu.memory_space<semaphore_mem>>
    %161 = tpu.memref_squeeze %160 : memref<1x!tpu.dma_semaphore, #tpu.memory_space<semaphore_mem>> -> memref<!tpu.dma_semaphore, #tpu.memory_space<semaphore_mem>>
    tpu.enqueue_dma source(%158 : memref<1x256xf32, #tpu.memory_space<any>>) target(%159 : memref<1x256xf32, #tpu.memory_space<vmem>>) target_semaphore(%161 : memref<!tpu.dma_semaphore, #tpu.memory_space<semaphore_mem>>)
    %c23_i32 = arith.constant 23 : i32
    %162 = arith.addi %0, %c23_i32 : i32
    %163 = arith.index_cast %162 : i32 to index
    %164 = memref.load %arg1[%163] : memref<256xi32, #tpu.memory_space<smem>>
    %c23_i32_92 = arith.constant 23 : i32
    %c0_i32_93 = arith.constant 0 : i32
    %165 = tpu.memref_slice %arg2[%164, %c0_i32_93] : memref<256x256xf32, #tpu.memory_space<any>> -> memref<1x256xf32, #tpu.memory_space<any>>
    %c23_i32_94 = arith.constant 23 : i32
    %c0_i32_95 = arith.constant 0 : i32
    %166 = tpu.memref_slice %arg4[%c23_i32_94, %c0_i32_95] : memref<32x256xf32, #tpu.memory_space<vmem>> -> memref<1x256xf32, #tpu.memory_space<vmem>>
    %167 = tpu.memref_slice %arg5[%c23_i32_92] : memref<32x!tpu.dma_semaphore, #tpu.memory_space<semaphore_mem>> -> memref<1x!tpu.dma_semaphore, #tpu.memory_space<semaphore_mem>>
    %168 = tpu.memref_squeeze %167 : memref<1x!tpu.dma_semaphore, #tpu.memory_space<semaphore_mem>> -> memref<!tpu.dma_semaphore, #tpu.memory_space<semaphore_mem>>
    tpu.enqueue_dma source(%165 : memref<1x256xf32, #tpu.memory_space<any>>) target(%166 : memref<1x256xf32, #tpu.memory_space<vmem>>) target_semaphore(%168 : memref<!tpu.dma_semaphore, #tpu.memory_space<semaphore_mem>>)
    %c24_i32 = arith.constant 24 : i32
    %169 = arith.addi %0, %c24_i32 : i32
    %170 = arith.index_cast %169 : i32 to index
    %171 = memref.load %arg1[%170] : memref<256xi32, #tpu.memory_space<smem>>
    %c24_i32_96 = arith.constant 24 : i32
    %c0_i32_97 = arith.constant 0 : i32
    %172 = tpu.memref_slice %arg2[%171, %c0_i32_97] : memref<256x256xf32, #tpu.memory_space<any>> -> memref<1x256xf32, #tpu.memory_space<any>>
    %c24_i32_98 = arith.constant 24 : i32
    %c0_i32_99 = arith.constant 0 : i32
    %173 = tpu.memref_slice %arg4[%c24_i32_98, %c0_i32_99] : memref<32x256xf32, #tpu.memory_space<vmem>> -> memref<1x256xf32, #tpu.memory_space<vmem>>
    %174 = tpu.memref_slice %arg5[%c24_i32_96] : memref<32x!tpu.dma_semaphore, #tpu.memory_space<semaphore_mem>> -> memref<1x!tpu.dma_semaphore, #tpu.memory_space<semaphore_mem>>
    %175 = tpu.memref_squeeze %174 : memref<1x!tpu.dma_semaphore, #tpu.memory_space<semaphore_mem>> -> memref<!tpu.dma_semaphore, #tpu.memory_space<semaphore_mem>>
    tpu.enqueue_dma source(%172 : memref<1x256xf32, #tpu.memory_space<any>>) target(%173 : memref<1x256xf32, #tpu.memory_space<vmem>>) target_semaphore(%175 : memref<!tpu.dma_semaphore, #tpu.memory_space<semaphore_mem>>)
    %c25_i32 = arith.constant 25 : i32
    %176 = arith.addi %0, %c25_i32 : i32
    %177 = arith.index_cast %176 : i32 to index
    %178 = memref.load %arg1[%177] : memref<256xi32, #tpu.memory_space<smem>>
    %c25_i32_100 = arith.constant 25 : i32
    %c0_i32_101 = arith.constant 0 : i32
    %179 = tpu.memref_slice %arg2[%178, %c0_i32_101] : memref<256x256xf32, #tpu.memory_space<any>> -> memref<1x256xf32, #tpu.memory_space<any>>
    %c25_i32_102 = arith.constant 25 : i32
    %c0_i32_103 = arith.constant 0 : i32
    %180 = tpu.memref_slice %arg4[%c25_i32_102, %c0_i32_103] : memref<32x256xf32, #tpu.memory_space<vmem>> -> memref<1x256xf32, #tpu.memory_space<vmem>>
    %181 = tpu.memref_slice %arg5[%c25_i32_100] : memref<32x!tpu.dma_semaphore, #tpu.memory_space<semaphore_mem>> -> memref<1x!tpu.dma_semaphore, #tpu.memory_space<semaphore_mem>>
    %182 = tpu.memref_squeeze %181 : memref<1x!tpu.dma_semaphore, #tpu.memory_space<semaphore_mem>> -> memref<!tpu.dma_semaphore, #tpu.memory_space<semaphore_mem>>
    tpu.enqueue_dma source(%179 : memref<1x256xf32, #tpu.memory_space<any>>) target(%180 : memref<1x256xf32, #tpu.memory_space<vmem>>) target_semaphore(%182 : memref<!tpu.dma_semaphore, #tpu.memory_space<semaphore_mem>>)
    %c26_i32 = arith.constant 26 : i32
    %183 = arith.addi %0, %c26_i32 : i32
    %184 = arith.index_cast %183 : i32 to index
    %185 = memref.load %arg1[%184] : memref<256xi32, #tpu.memory_space<smem>>
    %c26_i32_104 = arith.constant 26 : i32
    %c0_i32_105 = arith.constant 0 : i32
    %186 = tpu.memref_slice %arg2[%185, %c0_i32_105] : memref<256x256xf32, #tpu.memory_space<any>> -> memref<1x256xf32, #tpu.memory_space<any>>
    %c26_i32_106 = arith.constant 26 : i32
    %c0_i32_107 = arith.constant 0 : i32
    %187 = tpu.memref_slice %arg4[%c26_i32_106, %c0_i32_107] : memref<32x256xf32, #tpu.memory_space<vmem>> -> memref<1x256xf32, #tpu.memory_space<vmem>>
    %188 = tpu.memref_slice %arg5[%c26_i32_104] : memref<32x!tpu.dma_semaphore, #tpu.memory_space<semaphore_mem>> -> memref<1x!tpu.dma_semaphore, #tpu.memory_space<semaphore_mem>>
    %189 = tpu.memref_squeeze %188 : memref<1x!tpu.dma_semaphore, #tpu.memory_space<semaphore_mem>> -> memref<!tpu.dma_semaphore, #tpu.memory_space<semaphore_mem>>
    tpu.enqueue_dma source(%186 : memref<1x256xf32, #tpu.memory_space<any>>) target(%187 : memref<1x256xf32, #tpu.memory_space<vmem>>) target_semaphore(%189 : memref<!tpu.dma_semaphore, #tpu.memory_space<semaphore_mem>>)
    %c27_i32 = arith.constant 27 : i32
    %190 = arith.addi %0, %c27_i32 : i32
    %191 = arith.index_cast %190 : i32 to index
    %192 = memref.load %arg1[%191] : memref<256xi32, #tpu.memory_space<smem>>
    %c27_i32_108 = arith.constant 27 : i32
    %c0_i32_109 = arith.constant 0 : i32
    %193 = tpu.memref_slice %arg2[%192, %c0_i32_109] : memref<256x256xf32, #tpu.memory_space<any>> -> memref<1x256xf32, #tpu.memory_space<any>>
    %c27_i32_110 = arith.constant 27 : i32
    %c0_i32_111 = arith.constant 0 : i32
    %194 = tpu.memref_slice %arg4[%c27_i32_110, %c0_i32_111] : memref<32x256xf32, #tpu.memory_space<vmem>> -> memref<1x256xf32, #tpu.memory_space<vmem>>
    %195 = tpu.memref_slice %arg5[%c27_i32_108] : memref<32x!tpu.dma_semaphore, #tpu.memory_space<semaphore_mem>> -> memref<1x!tpu.dma_semaphore, #tpu.memory_space<semaphore_mem>>
    %196 = tpu.memref_squeeze %195 : memref<1x!tpu.dma_semaphore, #tpu.memory_space<semaphore_mem>> -> memref<!tpu.dma_semaphore, #tpu.memory_space<semaphore_mem>>
    tpu.enqueue_dma source(%193 : memref<1x256xf32, #tpu.memory_space<any>>) target(%194 : memref<1x256xf32, #tpu.memory_space<vmem>>) target_semaphore(%196 : memref<!tpu.dma_semaphore, #tpu.memory_space<semaphore_mem>>)
    %c28_i32 = arith.constant 28 : i32
    %197 = arith.addi %0, %c28_i32 : i32
    %198 = arith.index_cast %197 : i32 to index
    %199 = memref.load %arg1[%198] : memref<256xi32, #tpu.memory_space<smem>>
    %c28_i32_112 = arith.constant 28 : i32
    %c0_i32_113 = arith.constant 0 : i32
    %200 = tpu.memref_slice %arg2[%199, %c0_i32_113] : memref<256x256xf32, #tpu.memory_space<any>> -> memref<1x256xf32, #tpu.memory_space<any>>
    %c28_i32_114 = arith.constant 28 : i32
    %c0_i32_115 = arith.constant 0 : i32
    %201 = tpu.memref_slice %arg4[%c28_i32_114, %c0_i32_115] : memref<32x256xf32, #tpu.memory_space<vmem>> -> memref<1x256xf32, #tpu.memory_space<vmem>>
    %202 = tpu.memref_slice %arg5[%c28_i32_112] : memref<32x!tpu.dma_semaphore, #tpu.memory_space<semaphore_mem>> -> memref<1x!tpu.dma_semaphore, #tpu.memory_space<semaphore_mem>>
    %203 = tpu.memref_squeeze %202 : memref<1x!tpu.dma_semaphore, #tpu.memory_space<semaphore_mem>> -> memref<!tpu.dma_semaphore, #tpu.memory_space<semaphore_mem>>
    tpu.enqueue_dma source(%200 : memref<1x256xf32, #tpu.memory_space<any>>) target(%201 : memref<1x256xf32, #tpu.memory_space<vmem>>) target_semaphore(%203 : memref<!tpu.dma_semaphore, #tpu.memory_space<semaphore_mem>>)
    %c29_i32 = arith.constant 29 : i32
    %204 = arith.addi %0, %c29_i32 : i32
    %205 = arith.index_cast %204 : i32 to index
    %206 = memref.load %arg1[%205] : memref<256xi32, #tpu.memory_space<smem>>
    %c29_i32_116 = arith.constant 29 : i32
    %c0_i32_117 = arith.constant 0 : i32
    %207 = tpu.memref_slice %arg2[%206, %c0_i32_117] : memref<256x256xf32, #tpu.memory_space<any>> -> memref<1x256xf32, #tpu.memory_space<any>>
    %c29_i32_118 = arith.constant 29 : i32
    %c0_i32_119 = arith.constant 0 : i32
    %208 = tpu.memref_slice %arg4[%c29_i32_118, %c0_i32_119] : memref<32x256xf32, #tpu.memory_space<vmem>> -> memref<1x256xf32, #tpu.memory_space<vmem>>
    %209 = tpu.memref_slice %arg5[%c29_i32_116] : memref<32x!tpu.dma_semaphore, #tpu.memory_space<semaphore_mem>> -> memref<1x!tpu.dma_semaphore, #tpu.memory_space<semaphore_mem>>
    %210 = tpu.memref_squeeze %209 : memref<1x!tpu.dma_semaphore, #tpu.memory_space<semaphore_mem>> -> memref<!tpu.dma_semaphore, #tpu.memory_space<semaphore_mem>>
    tpu.enqueue_dma source(%207 : memref<1x256xf32, #tpu.memory_space<any>>) target(%208 : memref<1x256xf32, #tpu.memory_space<vmem>>) target_semaphore(%210 : memref<!tpu.dma_semaphore, #tpu.memory_space<semaphore_mem>>)
    %c30_i32 = arith.constant 30 : i32
    %211 = arith.addi %0, %c30_i32 : i32
    %212 = arith.index_cast %211 : i32 to index
    %213 = memref.load %arg1[%212] : memref<256xi32, #tpu.memory_space<smem>>
    %c30_i32_120 = arith.constant 30 : i32
    %c0_i32_121 = arith.constant 0 : i32
    %214 = tpu.memref_slice %arg2[%213, %c0_i32_121] : memref<256x256xf32, #tpu.memory_space<any>> -> memref<1x256xf32, #tpu.memory_space<any>>
    %c30_i32_122 = arith.constant 30 : i32
    %c0_i32_123 = arith.constant 0 : i32
    %215 = tpu.memref_slice %arg4[%c30_i32_122, %c0_i32_123] : memref<32x256xf32, #tpu.memory_space<vmem>> -> memref<1x256xf32, #tpu.memory_space<vmem>>
    %216 = tpu.memref_slice %arg5[%c30_i32_120] : memref<32x!tpu.dma_semaphore, #tpu.memory_space<semaphore_mem>> -> memref<1x!tpu.dma_semaphore, #tpu.memory_space<semaphore_mem>>
    %217 = tpu.memref_squeeze %216 : memref<1x!tpu.dma_semaphore, #tpu.memory_space<semaphore_mem>> -> memref<!tpu.dma_semaphore, #tpu.memory_space<semaphore_mem>>
    tpu.enqueue_dma source(%214 : memref<1x256xf32, #tpu.memory_space<any>>) target(%215 : memref<1x256xf32, #tpu.memory_space<vmem>>) target_semaphore(%217 : memref<!tpu.dma_semaphore, #tpu.memory_space<semaphore_mem>>)
    %c31_i32 = arith.constant 31 : i32
    %218 = arith.addi %0, %c31_i32 : i32
    %219 = arith.index_cast %218 : i32 to index
    %220 = memref.load %arg1[%219] : memref<256xi32, #tpu.memory_space<smem>>
    %c31_i32_124 = arith.constant 31 : i32
    %c0_i32_125 = arith.constant 0 : i32
    %221 = tpu.memref_slice %arg2[%220, %c0_i32_125] : memref<256x256xf32, #tpu.memory_space<any>> -> memref<1x256xf32, #tpu.memory_space<any>>
    %c31_i32_126 = arith.constant 31 : i32
    %c0_i32_127 = arith.constant 0 : i32
    %222 = tpu.memref_slice %arg4[%c31_i32_126, %c0_i32_127] : memref<32x256xf32, #tpu.memory_space<vmem>> -> memref<1x256xf32, #tpu.memory_space<vmem>>
    %223 = tpu.memref_slice %arg5[%c31_i32_124] : memref<32x!tpu.dma_semaphore, #tpu.memory_space<semaphore_mem>> -> memref<1x!tpu.dma_semaphore, #tpu.memory_space<semaphore_mem>>
    %224 = tpu.memref_squeeze %223 : memref<1x!tpu.dma_semaphore, #tpu.memory_space<semaphore_mem>> -> memref<!tpu.dma_semaphore, #tpu.memory_space<semaphore_mem>>
    tpu.enqueue_dma source(%221 : memref<1x256xf32, #tpu.memory_space<any>>) target(%222 : memref<1x256xf32, #tpu.memory_space<vmem>>) target_semaphore(%224 : memref<!tpu.dma_semaphore, #tpu.memory_space<semaphore_mem>>)
    %c0_i32_128 = arith.constant 0 : i32
    %225 = arith.addi %0, %c0_i32_128 : i32
    %226 = arith.index_cast %225 : i32 to index
    %227 = memref.load %arg1[%226] : memref<256xi32, #tpu.memory_space<smem>>
    %c0_i32_129 = arith.constant 0 : i32
    %c0_i32_130 = arith.constant 0 : i32
    %228 = tpu.memref_slice %arg2[%227, %c0_i32_130] : memref<256x256xf32, #tpu.memory_space<any>> -> memref<1x256xf32, #tpu.memory_space<any>>
    %c0_i32_131 = arith.constant 0 : i32
    %c0_i32_132 = arith.constant 0 : i32
    %229 = tpu.memref_slice %arg4[%c0_i32_131, %c0_i32_132] : memref<32x256xf32, #tpu.memory_space<vmem>> -> memref<1x256xf32, #tpu.memory_space<vmem>>
    %230 = tpu.memref_slice %arg5[%c0_i32_129] : memref<32x!tpu.dma_semaphore, #tpu.memory_space<semaphore_mem>> -> memref<1x!tpu.dma_semaphore, #tpu.memory_space<semaphore_mem>>
    %231 = tpu.memref_squeeze %230 : memref<1x!tpu.dma_semaphore, #tpu.memory_space<semaphore_mem>> -> memref<!tpu.dma_semaphore, #tpu.memory_space<semaphore_mem>>
    tpu.wait_dma2 semaphore(%231 : memref<!tpu.dma_semaphore, #tpu.memory_space<semaphore_mem>>) src(%228 : memref<1x256xf32, #tpu.memory_space<any>>) dst(%229 : memref<1x256xf32, #tpu.memory_space<vmem>>)
    %c1_i32_133 = arith.constant 1 : i32
    %232 = arith.addi %0, %c1_i32_133 : i32
    %233 = arith.index_cast %232 : i32 to index
    %234 = memref.load %arg1[%233] : memref<256xi32, #tpu.memory_space<smem>>
    %c1_i32_134 = arith.constant 1 : i32
    %c0_i32_135 = arith.constant 0 : i32
    %235 = tpu.memref_slice %arg2[%234, %c0_i32_135] : memref<256x256xf32, #tpu.memory_space<any>> -> memref<1x256xf32, #tpu.memory_space<any>>
    %c1_i32_136 = arith.constant 1 : i32
    %c0_i32_137 = arith.constant 0 : i32
    %236 = tpu.memref_slice %arg4[%c1_i32_136, %c0_i32_137] : memref<32x256xf32, #tpu.memory_space<vmem>> -> memref<1x256xf32, #tpu.memory_space<vmem>>
    %237 = tpu.memref_slice %arg5[%c1_i32_134] : memref<32x!tpu.dma_semaphore, #tpu.memory_space<semaphore_mem>> -> memref<1x!tpu.dma_semaphore, #tpu.memory_space<semaphore_mem>>
    %238 = tpu.memref_squeeze %237 : memref<1x!tpu.dma_semaphore, #tpu.memory_space<semaphore_mem>> -> memref<!tpu.dma_semaphore, #tpu.memory_space<semaphore_mem>>
    tpu.wait_dma2 semaphore(%238 : memref<!tpu.dma_semaphore, #tpu.memory_space<semaphore_mem>>) src(%235 : memref<1x256xf32, #tpu.memory_space<any>>) dst(%236 : memref<1x256xf32, #tpu.memory_space<vmem>>)
    %c2_i32_138 = arith.constant 2 : i32
    %239 = arith.addi %0, %c2_i32_138 : i32
    %240 = arith.index_cast %239 : i32 to index
    %241 = memref.load %arg1[%240] : memref<256xi32, #tpu.memory_space<smem>>
    %c2_i32_139 = arith.constant 2 : i32
    %c0_i32_140 = arith.constant 0 : i32
    %242 = tpu.memref_slice %arg2[%241, %c0_i32_140] : memref<256x256xf32, #tpu.memory_space<any>> -> memref<1x256xf32, #tpu.memory_space<any>>
    %c2_i32_141 = arith.constant 2 : i32
    %c0_i32_142 = arith.constant 0 : i32
    %243 = tpu.memref_slice %arg4[%c2_i32_141, %c0_i32_142] : memref<32x256xf32, #tpu.memory_space<vmem>> -> memref<1x256xf32, #tpu.memory_space<vmem>>
    %244 = tpu.memref_slice %arg5[%c2_i32_139] : memref<32x!tpu.dma_semaphore, #tpu.memory_space<semaphore_mem>> -> memref<1x!tpu.dma_semaphore, #tpu.memory_space<semaphore_mem>>
    %245 = tpu.memref_squeeze %244 : memref<1x!tpu.dma_semaphore, #tpu.memory_space<semaphore_mem>> -> memref<!tpu.dma_semaphore, #tpu.memory_space<semaphore_mem>>
    tpu.wait_dma2 semaphore(%245 : memref<!tpu.dma_semaphore, #tpu.memory_space<semaphore_mem>>) src(%242 : memref<1x256xf32, #tpu.memory_space<any>>) dst(%243 : memref<1x256xf32, #tpu.memory_space<vmem>>)
    %c3_i32_143 = arith.constant 3 : i32
    %246 = arith.addi %0, %c3_i32_143 : i32
    %247 = arith.index_cast %246 : i32 to index
    %248 = memref.load %arg1[%247] : memref<256xi32, #tpu.memory_space<smem>>
    %c3_i32_144 = arith.constant 3 : i32
    %c0_i32_145 = arith.constant 0 : i32
    %249 = tpu.memref_slice %arg2[%248, %c0_i32_145] : memref<256x256xf32, #tpu.memory_space<any>> -> memref<1x256xf32, #tpu.memory_space<any>>
    %c3_i32_146 = arith.constant 3 : i32
    %c0_i32_147 = arith.constant 0 : i32
    %250 = tpu.memref_slice %arg4[%c3_i32_146, %c0_i32_147] : memref<32x256xf32, #tpu.memory_space<vmem>> -> memref<1x256xf32, #tpu.memory_space<vmem>>
    %251 = tpu.memref_slice %arg5[%c3_i32_144] : memref<32x!tpu.dma_semaphore, #tpu.memory_space<semaphore_mem>> -> memref<1x!tpu.dma_semaphore, #tpu.memory_space<semaphore_mem>>
    %252 = tpu.memref_squeeze %251 : memref<1x!tpu.dma_semaphore, #tpu.memory_space<semaphore_mem>> -> memref<!tpu.dma_semaphore, #tpu.memory_space<semaphore_mem>>
    tpu.wait_dma2 semaphore(%252 : memref<!tpu.dma_semaphore, #tpu.memory_space<semaphore_mem>>) src(%249 : memref<1x256xf32, #tpu.memory_space<any>>) dst(%250 : memref<1x256xf32, #tpu.memory_space<vmem>>)
    %c4_i32_148 = arith.constant 4 : i32
    %253 = arith.addi %0, %c4_i32_148 : i32
    %254 = arith.index_cast %253 : i32 to index
    %255 = memref.load %arg1[%254] : memref<256xi32, #tpu.memory_space<smem>>
    %c4_i32_149 = arith.constant 4 : i32
    %c0_i32_150 = arith.constant 0 : i32
    %256 = tpu.memref_slice %arg2[%255, %c0_i32_150] : memref<256x256xf32, #tpu.memory_space<any>> -> memref<1x256xf32, #tpu.memory_space<any>>
    %c4_i32_151 = arith.constant 4 : i32
    %c0_i32_152 = arith.constant 0 : i32
    %257 = tpu.memref_slice %arg4[%c4_i32_151, %c0_i32_152] : memref<32x256xf32, #tpu.memory_space<vmem>> -> memref<1x256xf32, #tpu.memory_space<vmem>>
    %258 = tpu.memref_slice %arg5[%c4_i32_149] : memref<32x!tpu.dma_semaphore, #tpu.memory_space<semaphore_mem>> -> memref<1x!tpu.dma_semaphore, #tpu.memory_space<semaphore_mem>>
    %259 = tpu.memref_squeeze %258 : memref<1x!tpu.dma_semaphore, #tpu.memory_space<semaphore_mem>> -> memref<!tpu.dma_semaphore, #tpu.memory_space<semaphore_mem>>
    tpu.wait_dma2 semaphore(%259 : memref<!tpu.dma_semaphore, #tpu.memory_space<semaphore_mem>>) src(%256 : memref<1x256xf32, #tpu.memory_space<any>>) dst(%257 : memref<1x256xf32, #tpu.memory_space<vmem>>)
    %c5_i32_153 = arith.constant 5 : i32
    %260 = arith.addi %0, %c5_i32_153 : i32
    %261 = arith.index_cast %260 : i32 to index
    %262 = memref.load %arg1[%261] : memref<256xi32, #tpu.memory_space<smem>>
    %c5_i32_154 = arith.constant 5 : i32
    %c0_i32_155 = arith.constant 0 : i32
    %263 = tpu.memref_slice %arg2[%262, %c0_i32_155] : memref<256x256xf32, #tpu.memory_space<any>> -> memref<1x256xf32, #tpu.memory_space<any>>
    %c5_i32_156 = arith.constant 5 : i32
    %c0_i32_157 = arith.constant 0 : i32
    %264 = tpu.memref_slice %arg4[%c5_i32_156, %c0_i32_157] : memref<32x256xf32, #tpu.memory_space<vmem>> -> memref<1x256xf32, #tpu.memory_space<vmem>>
    %265 = tpu.memref_slice %arg5[%c5_i32_154] : memref<32x!tpu.dma_semaphore, #tpu.memory_space<semaphore_mem>> -> memref<1x!tpu.dma_semaphore, #tpu.memory_space<semaphore_mem>>
    %266 = tpu.memref_squeeze %265 : memref<1x!tpu.dma_semaphore, #tpu.memory_space<semaphore_mem>> -> memref<!tpu.dma_semaphore, #tpu.memory_space<semaphore_mem>>
    tpu.wait_dma2 semaphore(%266 : memref<!tpu.dma_semaphore, #tpu.memory_space<semaphore_mem>>) src(%263 : memref<1x256xf32, #tpu.memory_space<any>>) dst(%264 : memref<1x256xf32, #tpu.memory_space<vmem>>)
    %c6_i32_158 = arith.constant 6 : i32
    %267 = arith.addi %0, %c6_i32_158 : i32
    %268 = arith.index_cast %267 : i32 to index
    %269 = memref.load %arg1[%268] : memref<256xi32, #tpu.memory_space<smem>>
    %c6_i32_159 = arith.constant 6 : i32
    %c0_i32_160 = arith.constant 0 : i32
    %270 = tpu.memref_slice %arg2[%269, %c0_i32_160] : memref<256x256xf32, #tpu.memory_space<any>> -> memref<1x256xf32, #tpu.memory_space<any>>
    %c6_i32_161 = arith.constant 6 : i32
    %c0_i32_162 = arith.constant 0 : i32
    %271 = tpu.memref_slice %arg4[%c6_i32_161, %c0_i32_162] : memref<32x256xf32, #tpu.memory_space<vmem>> -> memref<1x256xf32, #tpu.memory_space<vmem>>
    %272 = tpu.memref_slice %arg5[%c6_i32_159] : memref<32x!tpu.dma_semaphore, #tpu.memory_space<semaphore_mem>> -> memref<1x!tpu.dma_semaphore, #tpu.memory_space<semaphore_mem>>
    %273 = tpu.memref_squeeze %272 : memref<1x!tpu.dma_semaphore, #tpu.memory_space<semaphore_mem>> -> memref<!tpu.dma_semaphore, #tpu.memory_space<semaphore_mem>>
    tpu.wait_dma2 semaphore(%273 : memref<!tpu.dma_semaphore, #tpu.memory_space<semaphore_mem>>) src(%270 : memref<1x256xf32, #tpu.memory_space<any>>) dst(%271 : memref<1x256xf32, #tpu.memory_space<vmem>>)
    %c7_i32_163 = arith.constant 7 : i32
    %274 = arith.addi %0, %c7_i32_163 : i32
    %275 = arith.index_cast %274 : i32 to index
    %276 = memref.load %arg1[%275] : memref<256xi32, #tpu.memory_space<smem>>
    %c7_i32_164 = arith.constant 7 : i32
    %c0_i32_165 = arith.constant 0 : i32
    %277 = tpu.memref_slice %arg2[%276, %c0_i32_165] : memref<256x256xf32, #tpu.memory_space<any>> -> memref<1x256xf32, #tpu.memory_space<any>>
    %c7_i32_166 = arith.constant 7 : i32
    %c0_i32_167 = arith.constant 0 : i32
    %278 = tpu.memref_slice %arg4[%c7_i32_166, %c0_i32_167] : memref<32x256xf32, #tpu.memory_space<vmem>> -> memref<1x256xf32, #tpu.memory_space<vmem>>
    %279 = tpu.memref_slice %arg5[%c7_i32_164] : memref<32x!tpu.dma_semaphore, #tpu.memory_space<semaphore_mem>> -> memref<1x!tpu.dma_semaphore, #tpu.memory_space<semaphore_mem>>
    %280 = tpu.memref_squeeze %279 : memref<1x!tpu.dma_semaphore, #tpu.memory_space<semaphore_mem>> -> memref<!tpu.dma_semaphore, #tpu.memory_space<semaphore_mem>>
    tpu.wait_dma2 semaphore(%280 : memref<!tpu.dma_semaphore, #tpu.memory_space<semaphore_mem>>) src(%277 : memref<1x256xf32, #tpu.memory_space<any>>) dst(%278 : memref<1x256xf32, #tpu.memory_space<vmem>>)
    %c8_i32_168 = arith.constant 8 : i32
    %281 = arith.addi %0, %c8_i32_168 : i32
    %282 = arith.index_cast %281 : i32 to index
    %283 = memref.load %arg1[%282] : memref<256xi32, #tpu.memory_space<smem>>
    %c8_i32_169 = arith.constant 8 : i32
    %c0_i32_170 = arith.constant 0 : i32
    %284 = tpu.memref_slice %arg2[%283, %c0_i32_170] : memref<256x256xf32, #tpu.memory_space<any>> -> memref<1x256xf32, #tpu.memory_space<any>>
    %c8_i32_171 = arith.constant 8 : i32
    %c0_i32_172 = arith.constant 0 : i32
    %285 = tpu.memref_slice %arg4[%c8_i32_171, %c0_i32_172] : memref<32x256xf32, #tpu.memory_space<vmem>> -> memref<1x256xf32, #tpu.memory_space<vmem>>
    %286 = tpu.memref_slice %arg5[%c8_i32_169] : memref<32x!tpu.dma_semaphore, #tpu.memory_space<semaphore_mem>> -> memref<1x!tpu.dma_semaphore, #tpu.memory_space<semaphore_mem>>
    %287 = tpu.memref_squeeze %286 : memref<1x!tpu.dma_semaphore, #tpu.memory_space<semaphore_mem>> -> memref<!tpu.dma_semaphore, #tpu.memory_space<semaphore_mem>>
    tpu.wait_dma2 semaphore(%287 : memref<!tpu.dma_semaphore, #tpu.memory_space<semaphore_mem>>) src(%284 : memref<1x256xf32, #tpu.memory_space<any>>) dst(%285 : memref<1x256xf32, #tpu.memory_space<vmem>>)
    %c9_i32_173 = arith.constant 9 : i32
    %288 = arith.addi %0, %c9_i32_173 : i32
    %289 = arith.index_cast %288 : i32 to index
    %290 = memref.load %arg1[%289] : memref<256xi32, #tpu.memory_space<smem>>
    %c9_i32_174 = arith.constant 9 : i32
    %c0_i32_175 = arith.constant 0 : i32
    %291 = tpu.memref_slice %arg2[%290, %c0_i32_175] : memref<256x256xf32, #tpu.memory_space<any>> -> memref<1x256xf32, #tpu.memory_space<any>>
    %c9_i32_176 = arith.constant 9 : i32
    %c0_i32_177 = arith.constant 0 : i32
    %292 = tpu.memref_slice %arg4[%c9_i32_176, %c0_i32_177] : memref<32x256xf32, #tpu.memory_space<vmem>> -> memref<1x256xf32, #tpu.memory_space<vmem>>
    %293 = tpu.memref_slice %arg5[%c9_i32_174] : memref<32x!tpu.dma_semaphore, #tpu.memory_space<semaphore_mem>> -> memref<1x!tpu.dma_semaphore, #tpu.memory_space<semaphore_mem>>
    %294 = tpu.memref_squeeze %293 : memref<1x!tpu.dma_semaphore, #tpu.memory_space<semaphore_mem>> -> memref<!tpu.dma_semaphore, #tpu.memory_space<semaphore_mem>>
    tpu.wait_dma2 semaphore(%294 : memref<!tpu.dma_semaphore, #tpu.memory_space<semaphore_mem>>) src(%291 : memref<1x256xf32, #tpu.memory_space<any>>) dst(%292 : memref<1x256xf32, #tpu.memory_space<vmem>>)
    %c10_i32_178 = arith.constant 10 : i32
    %295 = arith.addi %0, %c10_i32_178 : i32
    %296 = arith.index_cast %295 : i32 to index
    %297 = memref.load %arg1[%296] : memref<256xi32, #tpu.memory_space<smem>>
    %c10_i32_179 = arith.constant 10 : i32
    %c0_i32_180 = arith.constant 0 : i32
    %298 = tpu.memref_slice %arg2[%297, %c0_i32_180] : memref<256x256xf32, #tpu.memory_space<any>> -> memref<1x256xf32, #tpu.memory_space<any>>
    %c10_i32_181 = arith.constant 10 : i32
    %c0_i32_182 = arith.constant 0 : i32
    %299 = tpu.memref_slice %arg4[%c10_i32_181, %c0_i32_182] : memref<32x256xf32, #tpu.memory_space<vmem>> -> memref<1x256xf32, #tpu.memory_space<vmem>>
    %300 = tpu.memref_slice %arg5[%c10_i32_179] : memref<32x!tpu.dma_semaphore, #tpu.memory_space<semaphore_mem>> -> memref<1x!tpu.dma_semaphore, #tpu.memory_space<semaphore_mem>>
    %301 = tpu.memref_squeeze %300 : memref<1x!tpu.dma_semaphore, #tpu.memory_space<semaphore_mem>> -> memref<!tpu.dma_semaphore, #tpu.memory_space<semaphore_mem>>
    tpu.wait_dma2 semaphore(%301 : memref<!tpu.dma_semaphore, #tpu.memory_space<semaphore_mem>>) src(%298 : memref<1x256xf32, #tpu.memory_space<any>>) dst(%299 : memref<1x256xf32, #tpu.memory_space<vmem>>)
    %c11_i32_183 = arith.constant 11 : i32
    %302 = arith.addi %0, %c11_i32_183 : i32
    %303 = arith.index_cast %302 : i32 to index
    %304 = memref.load %arg1[%303] : memref<256xi32, #tpu.memory_space<smem>>
    %c11_i32_184 = arith.constant 11 : i32
    %c0_i32_185 = arith.constant 0 : i32
    %305 = tpu.memref_slice %arg2[%304, %c0_i32_185] : memref<256x256xf32, #tpu.memory_space<any>> -> memref<1x256xf32, #tpu.memory_space<any>>
    %c11_i32_186 = arith.constant 11 : i32
    %c0_i32_187 = arith.constant 0 : i32
    %306 = tpu.memref_slice %arg4[%c11_i32_186, %c0_i32_187] : memref<32x256xf32, #tpu.memory_space<vmem>> -> memref<1x256xf32, #tpu.memory_space<vmem>>
    %307 = tpu.memref_slice %arg5[%c11_i32_184] : memref<32x!tpu.dma_semaphore, #tpu.memory_space<semaphore_mem>> -> memref<1x!tpu.dma_semaphore, #tpu.memory_space<semaphore_mem>>
    %308 = tpu.memref_squeeze %307 : memref<1x!tpu.dma_semaphore, #tpu.memory_space<semaphore_mem>> -> memref<!tpu.dma_semaphore, #tpu.memory_space<semaphore_mem>>
    tpu.wait_dma2 semaphore(%308 : memref<!tpu.dma_semaphore, #tpu.memory_space<semaphore_mem>>) src(%305 : memref<1x256xf32, #tpu.memory_space<any>>) dst(%306 : memref<1x256xf32, #tpu.memory_space<vmem>>)
    %c12_i32_188 = arith.constant 12 : i32
    %309 = arith.addi %0, %c12_i32_188 : i32
    %310 = arith.index_cast %309 : i32 to index
    %311 = memref.load %arg1[%310] : memref<256xi32, #tpu.memory_space<smem>>
    %c12_i32_189 = arith.constant 12 : i32
    %c0_i32_190 = arith.constant 0 : i32
    %312 = tpu.memref_slice %arg2[%311, %c0_i32_190] : memref<256x256xf32, #tpu.memory_space<any>> -> memref<1x256xf32, #tpu.memory_space<any>>
    %c12_i32_191 = arith.constant 12 : i32
    %c0_i32_192 = arith.constant 0 : i32
    %313 = tpu.memref_slice %arg4[%c12_i32_191, %c0_i32_192] : memref<32x256xf32, #tpu.memory_space<vmem>> -> memref<1x256xf32, #tpu.memory_space<vmem>>
    %314 = tpu.memref_slice %arg5[%c12_i32_189] : memref<32x!tpu.dma_semaphore, #tpu.memory_space<semaphore_mem>> -> memref<1x!tpu.dma_semaphore, #tpu.memory_space<semaphore_mem>>
    %315 = tpu.memref_squeeze %314 : memref<1x!tpu.dma_semaphore, #tpu.memory_space<semaphore_mem>> -> memref<!tpu.dma_semaphore, #tpu.memory_space<semaphore_mem>>
    tpu.wait_dma2 semaphore(%315 : memref<!tpu.dma_semaphore, #tpu.memory_space<semaphore_mem>>) src(%312 : memref<1x256xf32, #tpu.memory_space<any>>) dst(%313 : memref<1x256xf32, #tpu.memory_space<vmem>>)
    %c13_i32_193 = arith.constant 13 : i32
    %316 = arith.addi %0, %c13_i32_193 : i32
    %317 = arith.index_cast %316 : i32 to index
    %318 = memref.load %arg1[%317] : memref<256xi32, #tpu.memory_space<smem>>
    %c13_i32_194 = arith.constant 13 : i32
    %c0_i32_195 = arith.constant 0 : i32
    %319 = tpu.memref_slice %arg2[%318, %c0_i32_195] : memref<256x256xf32, #tpu.memory_space<any>> -> memref<1x256xf32, #tpu.memory_space<any>>
    %c13_i32_196 = arith.constant 13 : i32
    %c0_i32_197 = arith.constant 0 : i32
    %320 = tpu.memref_slice %arg4[%c13_i32_196, %c0_i32_197] : memref<32x256xf32, #tpu.memory_space<vmem>> -> memref<1x256xf32, #tpu.memory_space<vmem>>
    %321 = tpu.memref_slice %arg5[%c13_i32_194] : memref<32x!tpu.dma_semaphore, #tpu.memory_space<semaphore_mem>> -> memref<1x!tpu.dma_semaphore, #tpu.memory_space<semaphore_mem>>
    %322 = tpu.memref_squeeze %321 : memref<1x!tpu.dma_semaphore, #tpu.memory_space<semaphore_mem>> -> memref<!tpu.dma_semaphore, #tpu.memory_space<semaphore_mem>>
    tpu.wait_dma2 semaphore(%322 : memref<!tpu.dma_semaphore, #tpu.memory_space<semaphore_mem>>) src(%319 : memref<1x256xf32, #tpu.memory_space<any>>) dst(%320 : memref<1x256xf32, #tpu.memory_space<vmem>>)
    %c14_i32_198 = arith.constant 14 : i32
    %323 = arith.addi %0, %c14_i32_198 : i32
    %324 = arith.index_cast %323 : i32 to index
    %325 = memref.load %arg1[%324] : memref<256xi32, #tpu.memory_space<smem>>
    %c14_i32_199 = arith.constant 14 : i32
    %c0_i32_200 = arith.constant 0 : i32
    %326 = tpu.memref_slice %arg2[%325, %c0_i32_200] : memref<256x256xf32, #tpu.memory_space<any>> -> memref<1x256xf32, #tpu.memory_space<any>>
    %c14_i32_201 = arith.constant 14 : i32
    %c0_i32_202 = arith.constant 0 : i32
    %327 = tpu.memref_slice %arg4[%c14_i32_201, %c0_i32_202] : memref<32x256xf32, #tpu.memory_space<vmem>> -> memref<1x256xf32, #tpu.memory_space<vmem>>
    %328 = tpu.memref_slice %arg5[%c14_i32_199] : memref<32x!tpu.dma_semaphore, #tpu.memory_space<semaphore_mem>> -> memref<1x!tpu.dma_semaphore, #tpu.memory_space<semaphore_mem>>
    %329 = tpu.memref_squeeze %328 : memref<1x!tpu.dma_semaphore, #tpu.memory_space<semaphore_mem>> -> memref<!tpu.dma_semaphore, #tpu.memory_space<semaphore_mem>>
    tpu.wait_dma2 semaphore(%329 : memref<!tpu.dma_semaphore, #tpu.memory_space<semaphore_mem>>) src(%326 : memref<1x256xf32, #tpu.memory_space<any>>) dst(%327 : memref<1x256xf32, #tpu.memory_space<vmem>>)
    %c15_i32_203 = arith.constant 15 : i32
    %330 = arith.addi %0, %c15_i32_203 : i32
    %331 = arith.index_cast %330 : i32 to index
    %332 = memref.load %arg1[%331] : memref<256xi32, #tpu.memory_space<smem>>
    %c15_i32_204 = arith.constant 15 : i32
    %c0_i32_205 = arith.constant 0 : i32
    %333 = tpu.memref_slice %arg2[%332, %c0_i32_205] : memref<256x256xf32, #tpu.memory_space<any>> -> memref<1x256xf32, #tpu.memory_space<any>>
    %c15_i32_206 = arith.constant 15 : i32
    %c0_i32_207 = arith.constant 0 : i32
    %334 = tpu.memref_slice %arg4[%c15_i32_206, %c0_i32_207] : memref<32x256xf32, #tpu.memory_space<vmem>> -> memref<1x256xf32, #tpu.memory_space<vmem>>
    %335 = tpu.memref_slice %arg5[%c15_i32_204] : memref<32x!tpu.dma_semaphore, #tpu.memory_space<semaphore_mem>> -> memref<1x!tpu.dma_semaphore, #tpu.memory_space<semaphore_mem>>
    %336 = tpu.memref_squeeze %335 : memref<1x!tpu.dma_semaphore, #tpu.memory_space<semaphore_mem>> -> memref<!tpu.dma_semaphore, #tpu.memory_space<semaphore_mem>>
    tpu.wait_dma2 semaphore(%336 : memref<!tpu.dma_semaphore, #tpu.memory_space<semaphore_mem>>) src(%333 : memref<1x256xf32, #tpu.memory_space<any>>) dst(%334 : memref<1x256xf32, #tpu.memory_space<vmem>>)
    %c16_i32_208 = arith.constant 16 : i32
    %337 = arith.addi %0, %c16_i32_208 : i32
    %338 = arith.index_cast %337 : i32 to index
    %339 = memref.load %arg1[%338] : memref<256xi32, #tpu.memory_space<smem>>
    %c16_i32_209 = arith.constant 16 : i32
    %c0_i32_210 = arith.constant 0 : i32
    %340 = tpu.memref_slice %arg2[%339, %c0_i32_210] : memref<256x256xf32, #tpu.memory_space<any>> -> memref<1x256xf32, #tpu.memory_space<any>>
    %c16_i32_211 = arith.constant 16 : i32
    %c0_i32_212 = arith.constant 0 : i32
    %341 = tpu.memref_slice %arg4[%c16_i32_211, %c0_i32_212] : memref<32x256xf32, #tpu.memory_space<vmem>> -> memref<1x256xf32, #tpu.memory_space<vmem>>
    %342 = tpu.memref_slice %arg5[%c16_i32_209] : memref<32x!tpu.dma_semaphore, #tpu.memory_space<semaphore_mem>> -> memref<1x!tpu.dma_semaphore, #tpu.memory_space<semaphore_mem>>
    %343 = tpu.memref_squeeze %342 : memref<1x!tpu.dma_semaphore, #tpu.memory_space<semaphore_mem>> -> memref<!tpu.dma_semaphore, #tpu.memory_space<semaphore_mem>>
    tpu.wait_dma2 semaphore(%343 : memref<!tpu.dma_semaphore, #tpu.memory_space<semaphore_mem>>) src(%340 : memref<1x256xf32, #tpu.memory_space<any>>) dst(%341 : memref<1x256xf32, #tpu.memory_space<vmem>>)
    %c17_i32_213 = arith.constant 17 : i32
    %344 = arith.addi %0, %c17_i32_213 : i32
    %345 = arith.index_cast %344 : i32 to index
    %346 = memref.load %arg1[%345] : memref<256xi32, #tpu.memory_space<smem>>
    %c17_i32_214 = arith.constant 17 : i32
    %c0_i32_215 = arith.constant 0 : i32
    %347 = tpu.memref_slice %arg2[%346, %c0_i32_215] : memref<256x256xf32, #tpu.memory_space<any>> -> memref<1x256xf32, #tpu.memory_space<any>>
    %c17_i32_216 = arith.constant 17 : i32
    %c0_i32_217 = arith.constant 0 : i32
    %348 = tpu.memref_slice %arg4[%c17_i32_216, %c0_i32_217] : memref<32x256xf32, #tpu.memory_space<vmem>> -> memref<1x256xf32, #tpu.memory_space<vmem>>
    %349 = tpu.memref_slice %arg5[%c17_i32_214] : memref<32x!tpu.dma_semaphore, #tpu.memory_space<semaphore_mem>> -> memref<1x!tpu.dma_semaphore, #tpu.memory_space<semaphore_mem>>
    %350 = tpu.memref_squeeze %349 : memref<1x!tpu.dma_semaphore, #tpu.memory_space<semaphore_mem>> -> memref<!tpu.dma_semaphore, #tpu.memory_space<semaphore_mem>>
    tpu.wait_dma2 semaphore(%350 : memref<!tpu.dma_semaphore, #tpu.memory_space<semaphore_mem>>) src(%347 : memref<1x256xf32, #tpu.memory_space<any>>) dst(%348 : memref<1x256xf32, #tpu.memory_space<vmem>>)
    %c18_i32_218 = arith.constant 18 : i32
    %351 = arith.addi %0, %c18_i32_218 : i32
    %352 = arith.index_cast %351 : i32 to index
    %353 = memref.load %arg1[%352] : memref<256xi32, #tpu.memory_space<smem>>
    %c18_i32_219 = arith.constant 18 : i32
    %c0_i32_220 = arith.constant 0 : i32
    %354 = tpu.memref_slice %arg2[%353, %c0_i32_220] : memref<256x256xf32, #tpu.memory_space<any>> -> memref<1x256xf32, #tpu.memory_space<any>>
    %c18_i32_221 = arith.constant 18 : i32
    %c0_i32_222 = arith.constant 0 : i32
    %355 = tpu.memref_slice %arg4[%c18_i32_221, %c0_i32_222] : memref<32x256xf32, #tpu.memory_space<vmem>> -> memref<1x256xf32, #tpu.memory_space<vmem>>
    %356 = tpu.memref_slice %arg5[%c18_i32_219] : memref<32x!tpu.dma_semaphore, #tpu.memory_space<semaphore_mem>> -> memref<1x!tpu.dma_semaphore, #tpu.memory_space<semaphore_mem>>
    %357 = tpu.memref_squeeze %356 : memref<1x!tpu.dma_semaphore, #tpu.memory_space<semaphore_mem>> -> memref<!tpu.dma_semaphore, #tpu.memory_space<semaphore_mem>>
    tpu.wait_dma2 semaphore(%357 : memref<!tpu.dma_semaphore, #tpu.memory_space<semaphore_mem>>) src(%354 : memref<1x256xf32, #tpu.memory_space<any>>) dst(%355 : memref<1x256xf32, #tpu.memory_space<vmem>>)
    %c19_i32_223 = arith.constant 19 : i32
    %358 = arith.addi %0, %c19_i32_223 : i32
    %359 = arith.index_cast %358 : i32 to index
    %360 = memref.load %arg1[%359] : memref<256xi32, #tpu.memory_space<smem>>
    %c19_i32_224 = arith.constant 19 : i32
    %c0_i32_225 = arith.constant 0 : i32
    %361 = tpu.memref_slice %arg2[%360, %c0_i32_225] : memref<256x256xf32, #tpu.memory_space<any>> -> memref<1x256xf32, #tpu.memory_space<any>>
    %c19_i32_226 = arith.constant 19 : i32
    %c0_i32_227 = arith.constant 0 : i32
    %362 = tpu.memref_slice %arg4[%c19_i32_226, %c0_i32_227] : memref<32x256xf32, #tpu.memory_space<vmem>> -> memref<1x256xf32, #tpu.memory_space<vmem>>
    %363 = tpu.memref_slice %arg5[%c19_i32_224] : memref<32x!tpu.dma_semaphore, #tpu.memory_space<semaphore_mem>> -> memref<1x!tpu.dma_semaphore, #tpu.memory_space<semaphore_mem>>
    %364 = tpu.memref_squeeze %363 : memref<1x!tpu.dma_semaphore, #tpu.memory_space<semaphore_mem>> -> memref<!tpu.dma_semaphore, #tpu.memory_space<semaphore_mem>>
    tpu.wait_dma2 semaphore(%364 : memref<!tpu.dma_semaphore, #tpu.memory_space<semaphore_mem>>) src(%361 : memref<1x256xf32, #tpu.memory_space<any>>) dst(%362 : memref<1x256xf32, #tpu.memory_space<vmem>>)
    %c20_i32_228 = arith.constant 20 : i32
    %365 = arith.addi %0, %c20_i32_228 : i32
    %366 = arith.index_cast %365 : i32 to index
    %367 = memref.load %arg1[%366] : memref<256xi32, #tpu.memory_space<smem>>
    %c20_i32_229 = arith.constant 20 : i32
    %c0_i32_230 = arith.constant 0 : i32
    %368 = tpu.memref_slice %arg2[%367, %c0_i32_230] : memref<256x256xf32, #tpu.memory_space<any>> -> memref<1x256xf32, #tpu.memory_space<any>>
    %c20_i32_231 = arith.constant 20 : i32
    %c0_i32_232 = arith.constant 0 : i32
    %369 = tpu.memref_slice %arg4[%c20_i32_231, %c0_i32_232] : memref<32x256xf32, #tpu.memory_space<vmem>> -> memref<1x256xf32, #tpu.memory_space<vmem>>
    %370 = tpu.memref_slice %arg5[%c20_i32_229] : memref<32x!tpu.dma_semaphore, #tpu.memory_space<semaphore_mem>> -> memref<1x!tpu.dma_semaphore, #tpu.memory_space<semaphore_mem>>
    %371 = tpu.memref_squeeze %370 : memref<1x!tpu.dma_semaphore, #tpu.memory_space<semaphore_mem>> -> memref<!tpu.dma_semaphore, #tpu.memory_space<semaphore_mem>>
    tpu.wait_dma2 semaphore(%371 : memref<!tpu.dma_semaphore, #tpu.memory_space<semaphore_mem>>) src(%368 : memref<1x256xf32, #tpu.memory_space<any>>) dst(%369 : memref<1x256xf32, #tpu.memory_space<vmem>>)
    %c21_i32_233 = arith.constant 21 : i32
    %372 = arith.addi %0, %c21_i32_233 : i32
    %373 = arith.index_cast %372 : i32 to index
    %374 = memref.load %arg1[%373] : memref<256xi32, #tpu.memory_space<smem>>
    %c21_i32_234 = arith.constant 21 : i32
    %c0_i32_235 = arith.constant 0 : i32
    %375 = tpu.memref_slice %arg2[%374, %c0_i32_235] : memref<256x256xf32, #tpu.memory_space<any>> -> memref<1x256xf32, #tpu.memory_space<any>>
    %c21_i32_236 = arith.constant 21 : i32
    %c0_i32_237 = arith.constant 0 : i32
    %376 = tpu.memref_slice %arg4[%c21_i32_236, %c0_i32_237] : memref<32x256xf32, #tpu.memory_space<vmem>> -> memref<1x256xf32, #tpu.memory_space<vmem>>
    %377 = tpu.memref_slice %arg5[%c21_i32_234] : memref<32x!tpu.dma_semaphore, #tpu.memory_space<semaphore_mem>> -> memref<1x!tpu.dma_semaphore, #tpu.memory_space<semaphore_mem>>
    %378 = tpu.memref_squeeze %377 : memref<1x!tpu.dma_semaphore, #tpu.memory_space<semaphore_mem>> -> memref<!tpu.dma_semaphore, #tpu.memory_space<semaphore_mem>>
    tpu.wait_dma2 semaphore(%378 : memref<!tpu.dma_semaphore, #tpu.memory_space<semaphore_mem>>) src(%375 : memref<1x256xf32, #tpu.memory_space<any>>) dst(%376 : memref<1x256xf32, #tpu.memory_space<vmem>>)
    %c22_i32_238 = arith.constant 22 : i32
    %379 = arith.addi %0, %c22_i32_238 : i32
    %380 = arith.index_cast %379 : i32 to index
    %381 = memref.load %arg1[%380] : memref<256xi32, #tpu.memory_space<smem>>
    %c22_i32_239 = arith.constant 22 : i32
    %c0_i32_240 = arith.constant 0 : i32
    %382 = tpu.memref_slice %arg2[%381, %c0_i32_240] : memref<256x256xf32, #tpu.memory_space<any>> -> memref<1x256xf32, #tpu.memory_space<any>>
    %c22_i32_241 = arith.constant 22 : i32
    %c0_i32_242 = arith.constant 0 : i32
    %383 = tpu.memref_slice %arg4[%c22_i32_241, %c0_i32_242] : memref<32x256xf32, #tpu.memory_space<vmem>> -> memref<1x256xf32, #tpu.memory_space<vmem>>
    %384 = tpu.memref_slice %arg5[%c22_i32_239] : memref<32x!tpu.dma_semaphore, #tpu.memory_space<semaphore_mem>> -> memref<1x!tpu.dma_semaphore, #tpu.memory_space<semaphore_mem>>
    %385 = tpu.memref_squeeze %384 : memref<1x!tpu.dma_semaphore, #tpu.memory_space<semaphore_mem>> -> memref<!tpu.dma_semaphore, #tpu.memory_space<semaphore_mem>>
    tpu.wait_dma2 semaphore(%385 : memref<!tpu.dma_semaphore, #tpu.memory_space<semaphore_mem>>) src(%382 : memref<1x256xf32, #tpu.memory_space<any>>) dst(%383 : memref<1x256xf32, #tpu.memory_space<vmem>>)
    %c23_i32_243 = arith.constant 23 : i32
    %386 = arith.addi %0, %c23_i32_243 : i32
    %387 = arith.index_cast %386 : i32 to index
    %388 = memref.load %arg1[%387] : memref<256xi32, #tpu.memory_space<smem>>
    %c23_i32_244 = arith.constant 23 : i32
    %c0_i32_245 = arith.constant 0 : i32
    %389 = tpu.memref_slice %arg2[%388, %c0_i32_245] : memref<256x256xf32, #tpu.memory_space<any>> -> memref<1x256xf32, #tpu.memory_space<any>>
    %c23_i32_246 = arith.constant 23 : i32
    %c0_i32_247 = arith.constant 0 : i32
    %390 = tpu.memref_slice %arg4[%c23_i32_246, %c0_i32_247] : memref<32x256xf32, #tpu.memory_space<vmem>> -> memref<1x256xf32, #tpu.memory_space<vmem>>
    %391 = tpu.memref_slice %arg5[%c23_i32_244] : memref<32x!tpu.dma_semaphore, #tpu.memory_space<semaphore_mem>> -> memref<1x!tpu.dma_semaphore, #tpu.memory_space<semaphore_mem>>
    %392 = tpu.memref_squeeze %391 : memref<1x!tpu.dma_semaphore, #tpu.memory_space<semaphore_mem>> -> memref<!tpu.dma_semaphore, #tpu.memory_space<semaphore_mem>>
    tpu.wait_dma2 semaphore(%392 : memref<!tpu.dma_semaphore, #tpu.memory_space<semaphore_mem>>) src(%389 : memref<1x256xf32, #tpu.memory_space<any>>) dst(%390 : memref<1x256xf32, #tpu.memory_space<vmem>>)
    %c24_i32_248 = arith.constant 24 : i32
    %393 = arith.addi %0, %c24_i32_248 : i32
    %394 = arith.index_cast %393 : i32 to index
    %395 = memref.load %arg1[%394] : memref<256xi32, #tpu.memory_space<smem>>
    %c24_i32_249 = arith.constant 24 : i32
    %c0_i32_250 = arith.constant 0 : i32
    %396 = tpu.memref_slice %arg2[%395, %c0_i32_250] : memref<256x256xf32, #tpu.memory_space<any>> -> memref<1x256xf32, #tpu.memory_space<any>>
    %c24_i32_251 = arith.constant 24 : i32
    %c0_i32_252 = arith.constant 0 : i32
    %397 = tpu.memref_slice %arg4[%c24_i32_251, %c0_i32_252] : memref<32x256xf32, #tpu.memory_space<vmem>> -> memref<1x256xf32, #tpu.memory_space<vmem>>
    %398 = tpu.memref_slice %arg5[%c24_i32_249] : memref<32x!tpu.dma_semaphore, #tpu.memory_space<semaphore_mem>> -> memref<1x!tpu.dma_semaphore, #tpu.memory_space<semaphore_mem>>
    %399 = tpu.memref_squeeze %398 : memref<1x!tpu.dma_semaphore, #tpu.memory_space<semaphore_mem>> -> memref<!tpu.dma_semaphore, #tpu.memory_space<semaphore_mem>>
    tpu.wait_dma2 semaphore(%399 : memref<!tpu.dma_semaphore, #tpu.memory_space<semaphore_mem>>) src(%396 : memref<1x256xf32, #tpu.memory_space<any>>) dst(%397 : memref<1x256xf32, #tpu.memory_space<vmem>>)
    %c25_i32_253 = arith.constant 25 : i32
    %400 = arith.addi %0, %c25_i32_253 : i32
    %401 = arith.index_cast %400 : i32 to index
    %402 = memref.load %arg1[%401] : memref<256xi32, #tpu.memory_space<smem>>
    %c25_i32_254 = arith.constant 25 : i32
    %c0_i32_255 = arith.constant 0 : i32
    %403 = tpu.memref_slice %arg2[%402, %c0_i32_255] : memref<256x256xf32, #tpu.memory_space<any>> -> memref<1x256xf32, #tpu.memory_space<any>>
    %c25_i32_256 = arith.constant 25 : i32
    %c0_i32_257 = arith.constant 0 : i32
    %404 = tpu.memref_slice %arg4[%c25_i32_256, %c0_i32_257] : memref<32x256xf32, #tpu.memory_space<vmem>> -> memref<1x256xf32, #tpu.memory_space<vmem>>
    %405 = tpu.memref_slice %arg5[%c25_i32_254] : memref<32x!tpu.dma_semaphore, #tpu.memory_space<semaphore_mem>> -> memref<1x!tpu.dma_semaphore, #tpu.memory_space<semaphore_mem>>
    %406 = tpu.memref_squeeze %405 : memref<1x!tpu.dma_semaphore, #tpu.memory_space<semaphore_mem>> -> memref<!tpu.dma_semaphore, #tpu.memory_space<semaphore_mem>>
    tpu.wait_dma2 semaphore(%406 : memref<!tpu.dma_semaphore, #tpu.memory_space<semaphore_mem>>) src(%403 : memref<1x256xf32, #tpu.memory_space<any>>) dst(%404 : memref<1x256xf32, #tpu.memory_space<vmem>>)
    %c26_i32_258 = arith.constant 26 : i32
    %407 = arith.addi %0, %c26_i32_258 : i32
    %408 = arith.index_cast %407 : i32 to index
    %409 = memref.load %arg1[%408] : memref<256xi32, #tpu.memory_space<smem>>
    %c26_i32_259 = arith.constant 26 : i32
    %c0_i32_260 = arith.constant 0 : i32
    %410 = tpu.memref_slice %arg2[%409, %c0_i32_260] : memref<256x256xf32, #tpu.memory_space<any>> -> memref<1x256xf32, #tpu.memory_space<any>>
    %c26_i32_261 = arith.constant 26 : i32
    %c0_i32_262 = arith.constant 0 : i32
    %411 = tpu.memref_slice %arg4[%c26_i32_261, %c0_i32_262] : memref<32x256xf32, #tpu.memory_space<vmem>> -> memref<1x256xf32, #tpu.memory_space<vmem>>
    %412 = tpu.memref_slice %arg5[%c26_i32_259] : memref<32x!tpu.dma_semaphore, #tpu.memory_space<semaphore_mem>> -> memref<1x!tpu.dma_semaphore, #tpu.memory_space<semaphore_mem>>
    %413 = tpu.memref_squeeze %412 : memref<1x!tpu.dma_semaphore, #tpu.memory_space<semaphore_mem>> -> memref<!tpu.dma_semaphore, #tpu.memory_space<semaphore_mem>>
    tpu.wait_dma2 semaphore(%413 : memref<!tpu.dma_semaphore, #tpu.memory_space<semaphore_mem>>) src(%410 : memref<1x256xf32, #tpu.memory_space<any>>) dst(%411 : memref<1x256xf32, #tpu.memory_space<vmem>>)
    %c27_i32_263 = arith.constant 27 : i32
    %414 = arith.addi %0, %c27_i32_263 : i32
    %415 = arith.index_cast %414 : i32 to index
    %416 = memref.load %arg1[%415] : memref<256xi32, #tpu.memory_space<smem>>
    %c27_i32_264 = arith.constant 27 : i32
    %c0_i32_265 = arith.constant 0 : i32
    %417 = tpu.memref_slice %arg2[%416, %c0_i32_265] : memref<256x256xf32, #tpu.memory_space<any>> -> memref<1x256xf32, #tpu.memory_space<any>>
    %c27_i32_266 = arith.constant 27 : i32
    %c0_i32_267 = arith.constant 0 : i32
    %418 = tpu.memref_slice %arg4[%c27_i32_266, %c0_i32_267] : memref<32x256xf32, #tpu.memory_space<vmem>> -> memref<1x256xf32, #tpu.memory_space<vmem>>
    %419 = tpu.memref_slice %arg5[%c27_i32_264] : memref<32x!tpu.dma_semaphore, #tpu.memory_space<semaphore_mem>> -> memref<1x!tpu.dma_semaphore, #tpu.memory_space<semaphore_mem>>
    %420 = tpu.memref_squeeze %419 : memref<1x!tpu.dma_semaphore, #tpu.memory_space<semaphore_mem>> -> memref<!tpu.dma_semaphore, #tpu.memory_space<semaphore_mem>>
    tpu.wait_dma2 semaphore(%420 : memref<!tpu.dma_semaphore, #tpu.memory_space<semaphore_mem>>) src(%417 : memref<1x256xf32, #tpu.memory_space<any>>) dst(%418 : memref<1x256xf32, #tpu.memory_space<vmem>>)
    %c28_i32_268 = arith.constant 28 : i32
    %421 = arith.addi %0, %c28_i32_268 : i32
    %422 = arith.index_cast %421 : i32 to index
    %423 = memref.load %arg1[%422] : memref<256xi32, #tpu.memory_space<smem>>
    %c28_i32_269 = arith.constant 28 : i32
    %c0_i32_270 = arith.constant 0 : i32
    %424 = tpu.memref_slice %arg2[%423, %c0_i32_270] : memref<256x256xf32, #tpu.memory_space<any>> -> memref<1x256xf32, #tpu.memory_space<any>>
    %c28_i32_271 = arith.constant 28 : i32
    %c0_i32_272 = arith.constant 0 : i32
    %425 = tpu.memref_slice %arg4[%c28_i32_271, %c0_i32_272] : memref<32x256xf32, #tpu.memory_space<vmem>> -> memref<1x256xf32, #tpu.memory_space<vmem>>
    %426 = tpu.memref_slice %arg5[%c28_i32_269] : memref<32x!tpu.dma_semaphore, #tpu.memory_space<semaphore_mem>> -> memref<1x!tpu.dma_semaphore, #tpu.memory_space<semaphore_mem>>
    %427 = tpu.memref_squeeze %426 : memref<1x!tpu.dma_semaphore, #tpu.memory_space<semaphore_mem>> -> memref<!tpu.dma_semaphore, #tpu.memory_space<semaphore_mem>>
    tpu.wait_dma2 semaphore(%427 : memref<!tpu.dma_semaphore, #tpu.memory_space<semaphore_mem>>) src(%424 : memref<1x256xf32, #tpu.memory_space<any>>) dst(%425 : memref<1x256xf32, #tpu.memory_space<vmem>>)
    %c29_i32_273 = arith.constant 29 : i32
    %428 = arith.addi %0, %c29_i32_273 : i32
    %429 = arith.index_cast %428 : i32 to index
    %430 = memref.load %arg1[%429] : memref<256xi32, #tpu.memory_space<smem>>
    %c29_i32_274 = arith.constant 29 : i32
    %c0_i32_275 = arith.constant 0 : i32
    %431 = tpu.memref_slice %arg2[%430, %c0_i32_275] : memref<256x256xf32, #tpu.memory_space<any>> -> memref<1x256xf32, #tpu.memory_space<any>>
    %c29_i32_276 = arith.constant 29 : i32
    %c0_i32_277 = arith.constant 0 : i32
    %432 = tpu.memref_slice %arg4[%c29_i32_276, %c0_i32_277] : memref<32x256xf32, #tpu.memory_space<vmem>> -> memref<1x256xf32, #tpu.memory_space<vmem>>
    %433 = tpu.memref_slice %arg5[%c29_i32_274] : memref<32x!tpu.dma_semaphore, #tpu.memory_space<semaphore_mem>> -> memref<1x!tpu.dma_semaphore, #tpu.memory_space<semaphore_mem>>
    %434 = tpu.memref_squeeze %433 : memref<1x!tpu.dma_semaphore, #tpu.memory_space<semaphore_mem>> -> memref<!tpu.dma_semaphore, #tpu.memory_space<semaphore_mem>>
    tpu.wait_dma2 semaphore(%434 : memref<!tpu.dma_semaphore, #tpu.memory_space<semaphore_mem>>) src(%431 : memref<1x256xf32, #tpu.memory_space<any>>) dst(%432 : memref<1x256xf32, #tpu.memory_space<vmem>>)
    %c30_i32_278 = arith.constant 30 : i32
    %435 = arith.addi %0, %c30_i32_278 : i32
    %436 = arith.index_cast %435 : i32 to index
    %437 = memref.load %arg1[%436] : memref<256xi32, #tpu.memory_space<smem>>
    %c30_i32_279 = arith.constant 30 : i32
    %c0_i32_280 = arith.constant 0 : i32
    %438 = tpu.memref_slice %arg2[%437, %c0_i32_280] : memref<256x256xf32, #tpu.memory_space<any>> -> memref<1x256xf32, #tpu.memory_space<any>>
    %c30_i32_281 = arith.constant 30 : i32
    %c0_i32_282 = arith.constant 0 : i32
    %439 = tpu.memref_slice %arg4[%c30_i32_281, %c0_i32_282] : memref<32x256xf32, #tpu.memory_space<vmem>> -> memref<1x256xf32, #tpu.memory_space<vmem>>
    %440 = tpu.memref_slice %arg5[%c30_i32_279] : memref<32x!tpu.dma_semaphore, #tpu.memory_space<semaphore_mem>> -> memref<1x!tpu.dma_semaphore, #tpu.memory_space<semaphore_mem>>
    %441 = tpu.memref_squeeze %440 : memref<1x!tpu.dma_semaphore, #tpu.memory_space<semaphore_mem>> -> memref<!tpu.dma_semaphore, #tpu.memory_space<semaphore_mem>>
    tpu.wait_dma2 semaphore(%441 : memref<!tpu.dma_semaphore, #tpu.memory_space<semaphore_mem>>) src(%438 : memref<1x256xf32, #tpu.memory_space<any>>) dst(%439 : memref<1x256xf32, #tpu.memory_space<vmem>>)
    %c31_i32_283 = arith.constant 31 : i32
    %442 = arith.addi %0, %c31_i32_283 : i32
    %443 = arith.index_cast %442 : i32 to index
    %444 = memref.load %arg1[%443] : memref<256xi32, #tpu.memory_space<smem>>
    %c31_i32_284 = arith.constant 31 : i32
    %c0_i32_285 = arith.constant 0 : i32
    %445 = tpu.memref_slice %arg2[%444, %c0_i32_285] : memref<256x256xf32, #tpu.memory_space<any>> -> memref<1x256xf32, #tpu.memory_space<any>>
    %c31_i32_286 = arith.constant 31 : i32
    %c0_i32_287 = arith.constant 0 : i32
    %446 = tpu.memref_slice %arg4[%c31_i32_286, %c0_i32_287] : memref<32x256xf32, #tpu.memory_space<vmem>> -> memref<1x256xf32, #tpu.memory_space<vmem>>
    %447 = tpu.memref_slice %arg5[%c31_i32_284] : memref<32x!tpu.dma_semaphore, #tpu.memory_space<semaphore_mem>> -> memref<1x!tpu.dma_semaphore, #tpu.memory_space<semaphore_mem>>
    %448 = tpu.memref_squeeze %447 : memref<1x!tpu.dma_semaphore, #tpu.memory_space<semaphore_mem>> -> memref<!tpu.dma_semaphore, #tpu.memory_space<semaphore_mem>>
    tpu.wait_dma2 semaphore(%448 : memref<!tpu.dma_semaphore, #tpu.memory_space<semaphore_mem>>) src(%445 : memref<1x256xf32, #tpu.memory_space<any>>) dst(%446 : memref<1x256xf32, #tpu.memory_space<vmem>>)
    %c0 = arith.constant 0 : index
    %c0_288 = arith.constant 0 : index
    %449 = vector.load %arg4[%c0, %c0_288] : memref<32x256xf32, #tpu.memory_space<vmem>>, vector<32x256xf32>
    %cst = arith.constant 1.600000e+01 : f32
    %450 = vector.broadcast %cst : f32 to vector<32x256xf32>
    %451 = arith.mulf %449, %450 : vector<32x256xf32>
    %c0_289 = arith.constant 0 : index
    %c0_290 = arith.constant 0 : index
    %452 = vector.load %arg3[%c0_289, %c0_290] : memref<32x256xf32, #tpu.memory_space<vmem>>, vector<32x256xf32>
    tpu.vector_store %arg3[%c0_289, %c0_290], %451 {strides = array<i32>} : memref<32x256xf32, #tpu.memory_space<vmem>>, vector<32x256xf32>,
    return
  }
  func.func @transform_1(%arg0: i32, %arg1: memref<256xi32, #tpu.memory_space<smem>>) -> (i32, i32) {
    %c0_i32 = arith.constant 0 : i32
    %c0_i32_0 = arith.constant 0 : i32
    return %arg0, %c0_i32 : i32, i32
  }
}

</mosaic_0001>

<llo_original>
// kernel: tpu_custom_call.1
$region0: #{tpu_custom_call.1}
  #allocation0 [shape = 'u32[]', space=smem, size = 0x4, offset = 0x4, fixed_abs, tag = 'smem constant byte address 0x4 - core index']
  #allocation1 [shape = 'u32[144,128]{1,0:T(1,128)}', space=vmem, size = 0x12000, scoped, tag = 'internal scratch']
  %s0 = inlined_call_operand.hbm [shape: f32[128,128], index: 0, kind: input, shape index: {}]
  %s1 = inlined_call_operand.hbm [shape: f32[128,128], index: 1, kind: output, shape index: {}]
  %s2 = sld [smem:[#allocation0]]
  $region18: #{tpu_custom_call.1} parent=0
    _
  %s4 = ssub.s32 1, %s2
  %s5 = scalar_select 0, %s4, %s2
  $region1: #{tpu_custom_call.1} parent=0
    #allocation2 [shape = 'u8[65536]{0}', space=vmem, size = 0x10000, scoped, tag = 'input window, operand 0, single buffered']
    #allocation3 [shape = 's32[1]{0}', space=sflag, size = 0x4, scoped, tag = 'scoped memory for tpu_custom_call.1']
    #allocation4 [shape = 's32[1]{0}', space=sflag, size = 0x4, scoped, tag = 'scoped memory for tpu_custom_call.1']
    #allocation5 [shape = 'u8[65536]{0}', space=vmem, size = 0x10000, scoped, tag = 'output window, operand 0, single buffered']
    %6 = vsyncpa [#allocation3], 0
    %7 = vsyncpa [#allocation4], 0
    // Predicated region
    $region2: #{tpu_custom_call.1} parent=1 // pred_check
      _
    $region3: #{tpu_custom_call.1} parent=1 // pred_check_branch
      %9 = sbr.rel (0) target = $region5
    $region4: #{tpu_custom_call.1} parent=1 // pred_region
      %s11 = ssub.s32 2048, 2048
      %12 = vsyncadd [#allocation3], %s11
      %s13 = sshll.u32 [#allocation2], 4
      %s14 = int_to_ptr.vmem [resolvable:$true] %s13
      %19 = dma.hbm_to_vmem [thread:$0]  %s0, 2048, %s14, [#allocation3], 128, 128, 8
    $region5: #{tpu_custom_call.1} parent=1 // pred_fallthru
      _
    // Predicated region
    $region6: #{tpu_custom_call.1} parent=1 // pred_check
      _
    $region7: #{tpu_custom_call.1} parent=1 // pred_check_branch
      %21 = sbr.rel (0) target = $region9
    $region8: #{tpu_custom_call.1} parent=1 // pred_region
      %22 = dma.done [#allocation3], 2048
    $region9: #{tpu_custom_call.1} parent=1 // pred_fallthru
      _
    %v23 = vld [vmem:[#allocation2] sm:$0xff]
    %v24 = vld [vmem:[#allocation2 + $0x8] sm:$0xff]
    %v25 = vld [vmem:[#allocation2 + $0x10] sm:$0xff]
    %v26 = vld [vmem:[#allocation2 + $0x18] sm:$0xff]
    %v27 = vld [vmem:[#allocation2 + $0x20] sm:$0xff]
    %v28 = vld [vmem:[#allocation2 + $0x28] sm:$0xff]
    %v29 = vld [vmem:[#allocation2 + $0x30] sm:$0xff]
    %v30 = vld [vmem:[#allocation2 + $0x38] sm:$0xff]
    %v31 = vld [vmem:[#allocation2 + $0x40] sm:$0xff]
    %v32 = vld [vmem:[#allocation2 + $0x48] sm:$0xff]
    %v33 = vld [vmem:[#allocation2 + $0x50] sm:$0xff]
    %v34 = vld [vmem:[#allocation2 + $0x58] sm:$0xff]
    %v35 = vld [vmem:[#allocation2 + $0x60] sm:$0xff]
    %v36 = vld [vmem:[#allocation2 + $0x68] sm:$0xff]
    %v37 = vld [vmem:[#allocation2 + $0x70] sm:$0xff]
    %v38 = vld [vmem:[#allocation2 + $0x78] sm:$0xff]
    %s40 = sor.u32 256, 1
    %41 = vrot.lane.b32.xlu0 %v23, %s40
    %v42 = vpop.permute.xlu0 %41
    %s44 = sor.u32 256, 9
    %45 = vrot.lane.b32.xlu0 %v24, %s44
    %v46 = vpop.permute.xlu0 %45
    %s48 = sor.u32 256, 17
    %49 = vrot.lane.b32.xlu0 %v25, %s48
    %v50 = vpop.permute.xlu0 %49
    %s52 = sor.u32 256, 25
    %53 = vrot.lane.b32.xlu0 %v26, %s52
    %v54 = vpop.permute.xlu0 %53
    %s56 = sor.u32 256, 33
    %57 = vrot.lane.b32.xlu0 %v27, %s56
    %v58 = vpop.permute.xlu0 %57
    %s60 = sor.u32 256, 41
    %61 = vrot.lane.b32.xlu0 %v28, %s60
    %v62 = vpop.permute.xlu0 %61
    %s64 = sor.u32 256, 49
    %65 = vrot.lane.b32.xlu0 %v29, %s64
    %v66 = vpop.permute.xlu0 %65
    %s68 = sor.u32 256, 57
    %69 = vrot.lane.b32.xlu0 %v30, %s68
    %v70 = vpop.permute.xlu0 %69
    %s72 = sor.u32 256, 65
    %73 = vrot.lane.b32.xlu0 %v31, %s72
    %v74 = vpop.permute.xlu0 %73
    %s76 = sor.u32 256, 73
    %77 = vrot.lane.b32.xlu0 %v32, %s76
    %v78 = vpop.permute.xlu0 %77
    %s80 = sor.u32 256, 81
    %81 = vrot.lane.b32.xlu0 %v33, %s80
    %v82 = vpop.permute.xlu0 %81
    %s84 = sor.u32 256, 89
    %85 = vrot.lane.b32.xlu0 %v34, %s84
    %v86 = vpop.permute.xlu0 %85
    %s88 = sor.u32 256, 97
    %89 = vrot.lane.b32.xlu0 %v35, %s88
    %v90 = vpop.permute.xlu0 %89
    %s92 = sor.u32 256, 105
    %93 = vrot.lane.b32.xlu0 %v36, %s92
    %v94 = vpop.permute.xlu0 %93
    %s96 = sor.u32 256, 113
    %97 = vrot.lane.b32.xlu0 %v37, %s96
    %v98 = vpop.permute.xlu0 %97
    %s100 = sor.u32 256, 121
    %101 = vrot.lane.b32.xlu0 %v38, %s100
    %v102 = vpop.permute.xlu0 %101
    %103 = vst [vmem:[#allocation5] sm:$0xff] %v42
    %104 = vst [vmem:[#allocation5 + $0x8] sm:$0xff] %v46
    %105 = vst [vmem:[#allocation5 + $0x10] sm:$0xff] %v50
    %106 = vst [vmem:[#allocation5 + $0x18] sm:$0xff] %v54
    %107 = vst [vmem:[#allocation5 + $0x20] sm:$0xff] %v58
    %108 = vst [vmem:[#allocation5 + $0x28] sm:$0xff] %v62
    %109 = vst [vmem:[#allocation5 + $0x30] sm:$0xff] %v66
    %110 = vst [vmem:[#allocation5 + $0x38] sm:$0xff] %v70
    %111 = vst [vmem:[#allocation5 + $0x40] sm:$0xff] %v74
    %112 = vst [vmem:[#allocation5 + $0x48] sm:$0xff] %v78
    %113 = vst [vmem:[#allocation5 + $0x50] sm:$0xff] %v82
    %114 = vst [vmem:[#allocation5 + $0x58] sm:$0xff] %v86
    %115 = vst [vmem:[#allocation5 + $0x60] sm:$0xff] %v90
    %116 = vst [vmem:[#allocation5 + $0x68] sm:$0xff] %v94
    %117 = vst [vmem:[#allocation5 + $0x70] sm:$0xff] %v98
    %118 = vst [vmem:[#allocation5 + $0x78] sm:$0xff] %v102
    // Predicated region
    $region10: #{tpu_custom_call.1} parent=1 // pred_check
      _
    $region11: #{tpu_custom_call.1} parent=1 // pred_check_branch
      %120 = sbr.rel (0) target = $region13
    $region12: #{tpu_custom_call.1} parent=1 // pred_region
      %s122 = ssub.s32 2048, 2048
      %123 = vsyncadd [#allocation4], %s122
      %s124 = sshll.u32 [#allocation5], 4
      %s125 = int_to_ptr.vmem [resolvable:$true] %s124
      %130 = dma.vmem_to_hbm [thread:$0]  %s125, 2048, %s1, [#allocation4], 128, 128, 8
    $region13: #{tpu_custom_call.1} parent=1 // pred_fallthru
      _
    // Predicated region
    $region14: #{tpu_custom_call.1} parent=1 // pred_check
      _
    $region15: #{tpu_custom_call.1} parent=1 // pred_check_branch
      %132 = sbr.rel (0) target = $region17
    $region16: #{tpu_custom_call.1} parent=1 // pred_region
      %133 = dma.done [#allocation4], 2048
    $region17: #{tpu_custom_call.1} parent=1 // pred_fallthru
      _
    %134 = vsyncpa [#allocation3], 1
    %135 = vsyncpa [#allocation4], 1

// kernel: tpu_custom_call.1
$region0: #{tpu_custom_call.1}
  #allocation0 [shape = 'u32[]', space=smem, size = 0x4, offset = 0x4, fixed_abs, tag = 'smem constant byte address 0x4 - core index']
  #allocation1 [shape = 'u32[144,128]{1,0:T(1,128)}', space=vmem, size = 0x12000, scoped, tag = 'internal scratch']
  #allocation2 [shape = 'f32[32,256]{1,0:T(8,128)}', space=vmem, size = 0x8000, scoped, tag = 'scratch operand']
  #allocation3 [shape = 's32[32]{0}', space=sflag, size = 0x80, scoped, tag = 'scratch operand']
  #allocation4 [shape = 's32[1]{0}', space=sflag, size = 0x4, scoped, tag = 'scoped memory for tpu_custom_call.1']
  #allocation5 [shape = 'u8[1024]{0}', space=smem, size = 0x400, scoped, tag = 'prefetched SMEM operand 0']
  #allocation8 [shape = 's32[]', space=sflag, size = 0x4, offset = 0, fixed_abs, tag = 'sflag constant byte address 0x0 - dummy sync flag']
  #allocation9 [shape = 's32[]', space=sflag, size = 0x4, offset = 0, fixed_abs, tag = 'sflag constant byte address 0x0 - dummy sync flag']
  #allocation10 [shape = 's32[]', space=sflag, size = 0x4, offset = 0, fixed_abs, tag = 'sflag constant byte address 0x0 - dummy sync flag']
  #allocation11 [shape = 's32[]', space=sflag, size = 0x4, offset = 0, fixed_abs, tag = 'sflag constant byte address 0x0 - dummy sync flag']
  #allocation12 [shape = 's32[]', space=sflag, size = 0x4, offset = 0, fixed_abs, tag = 'sflag constant byte address 0x0 - dummy sync flag']
  #allocation13 [shape = 's32[]', space=sflag, size = 0x4, offset = 0, fixed_abs, tag = 'sflag constant byte address 0x0 - dummy sync flag']
  #allocation14 [shape = 's32[]', space=sflag, size = 0x4, offset = 0, fixed_abs, tag = 'sflag constant byte address 0x0 - dummy sync flag']
  #allocation15 [shape = 's32[]', space=sflag, size = 0x4, offset = 0, fixed_abs, tag = 'sflag constant byte address 0x0 - dummy sync flag']
  #allocation16 [shape = 's32[]', space=sflag, size = 0x4, offset = 0, fixed_abs, tag = 'sflag constant byte address 0x0 - dummy sync flag']
  #allocation17 [shape = 's32[]', space=sflag, size = 0x4, offset = 0, fixed_abs, tag = 'sflag constant byte address 0x0 - dummy sync flag']
  #allocation18 [shape = 's32[]', space=sflag, size = 0x4, offset = 0, fixed_abs, tag = 'sflag constant byte address 0x0 - dummy sync flag']
  #allocation19 [shape = 's32[]', space=sflag, size = 0x4, offset = 0, fixed_abs, tag = 'sflag constant byte address 0x0 - dummy sync flag']
  #allocation20 [shape = 's32[]', space=sflag, size = 0x4, offset = 0, fixed_abs, tag = 'sflag constant byte address 0x0 - dummy sync flag']
  #allocation21 [shape = 's32[]', space=sflag, size = 0x4, offset = 0, fixed_abs, tag = 'sflag constant byte address 0x0 - dummy sync flag']
  #allocation22 [shape = 's32[]', space=sflag, size = 0x4, offset = 0, fixed_abs, tag = 'sflag constant byte address 0x0 - dummy sync flag']
  #allocation23 [shape = 's32[]', space=sflag, size = 0x4, offset = 0, fixed_abs, tag = 'sflag constant byte address 0x0 - dummy sync flag']
  #allocation24 [shape = 's32[]', space=sflag, size = 0x4, offset = 0, fixed_abs, tag = 'sflag constant byte address 0x0 - dummy sync flag']
  #allocation25 [shape = 's32[]', space=sflag, size = 0x4, offset = 0, fixed_abs, tag = 'sflag constant byte address 0x0 - dummy sync flag']
  #allocation26 [shape = 's32[]', space=sflag, size = 0x4, offset = 0, fixed_abs, tag = 'sflag constant byte address 0x0 - dummy sync flag']
  #allocation27 [shape = 's32[]', space=sflag, size = 0x4, offset = 0, fixed_abs, tag = 'sflag constant byte address 0x0 - dummy sync flag']
  #allocation28 [shape = 's32[]', space=sflag, size = 0x4, offset = 0, fixed_abs, tag = 'sflag constant byte address 0x0 - dummy sync flag']
  #allocation29 [shape = 's32[]', space=sflag, size = 0x4, offset = 0, fixed_abs, tag = 'sflag constant byte address 0x0 - dummy sync flag']
  #allocation30 [shape = 's32[]', space=sflag, size = 0x4, offset = 0, fixed_abs, tag = 'sflag constant byte address 0x0 - dummy sync flag']
  #allocation31 [shape = 's32[]', space=sflag, size = 0x4, offset = 0, fixed_abs, tag = 'sflag constant byte address 0x0 - dummy sync flag']
  #allocation32 [shape = 's32[]', space=sflag, size = 0x4, offset = 0, fixed_abs, tag = 'sflag constant byte address 0x0 - dummy sync flag']
  #allocation33 [shape = 's32[]', space=sflag, size = 0x4, offset = 0, fixed_abs, tag = 'sflag constant byte address 0x0 - dummy sync flag']
  #allocation34 [shape = 's32[]', space=sflag, size = 0x4, offset = 0, fixed_abs, tag = 'sflag constant byte address 0x0 - dummy sync flag']
  #allocation35 [shape = 's32[]', space=sflag, size = 0x4, offset = 0, fixed_abs, tag = 'sflag constant byte address 0x0 - dummy sync flag']
  #allocation36 [shape = 's32[]', space=sflag, size = 0x4, offset = 0, fixed_abs, tag = 'sflag constant byte address 0x0 - dummy sync flag']
  #allocation37 [shape = 's32[]', space=sflag, size = 0x4, offset = 0, fixed_abs, tag = 'sflag constant byte address 0x0 - dummy sync flag']
  #allocation38 [shape = 's32[]', space=sflag, size = 0x4, offset = 0, fixed_abs, tag = 'sflag constant byte address 0x0 - dummy sync flag']
  #allocation39 [shape = 's32[]', space=sflag, size = 0x4, offset = 0, fixed_abs, tag = 'sflag constant byte address 0x0 - dummy sync flag']
  %s0 = inlined_call_operand.hbm [shape: s32[256], index: 0, kind: input, shape index: {}]
  %s1 = inlined_call_operand.hbm [shape: f32[256,256], index: 1, kind: input, shape index: {}]
  %s2 = inlined_call_operand.hbm [shape: f32[256,256], index: 2, kind: output, shape index: {}]
  %s3 = sld [smem:[#allocation0]]
  $region25: #{tpu_custom_call.1} parent=0
    _
  %s5 = ssub.s32 1, %s3
  %s6 = scalar_select 0, %s5, %s3
  %8 = dma.hbm_to_smem %s0, 32, [#allocation5], [#allocation4]
  %9 = dma.done [#allocation4], 32
  %10 = sfence
  $region1: #{tpu_custom_call.1} parent=0
    #allocation6 [shape = 'u8[65536]{0}', space=vmem, size = 0x10000, scoped, tag = 'output window, operand 0']
    #allocation7 [shape = 's32[2]{0}', space=sflag, size = 0x8, scoped, tag = 'scoped memory for tpu_custom_call.1']
    %11 = vsyncpa [#allocation7], 0
    %s12 = scalar_lea.sflag [#allocation7], 1
    %13 = vsyncpa %s12, 0
    loop: start=0, step=1, limit=9
    $region2: #{tpu_custom_call.1} parent=1 // loop_pre_header
      _
    $region3: #{tpu_custom_call.1} parent=1 // loop_header
      %s15 = sphi 0, %s19
      %p16 = scmp.ge.s32.totalorder %s15, 9
      %s24 = sphi 0, %s26
      %s27 = sphi 0, %s24
      %s37 = sphi 0, %s27
    $region4: #{tpu_custom_call.1} parent=1 // loop_header_branch
      %18 = sbr.rel (%p16) target = $region8
    $region5: #{tpu_custom_call.1} parent=1 // loop_body
      %s20 = ssub.s32 %s15, 1
      %s21 = sadd.s32 %s15, 1
      %s22 = ssub.s32 %s15, %s21
      %p23 = scmp.eq.s32.totalorder %s22, 0
      %s25 = sadd.s32 %s24, 1
      %s26 = scalar_select %p23, %s24, %s25
      %p28 = pneg %p23
      %p29 = scmp.eq.s32.totalorder %s15, 7
      %p30 = por %p28, %p29
      %p31 = scmp.ne.s32.totalorder %s24, %s27
      %p32 = scmp.eq.s32.totalorder %s15, 0
      %p33 = por %p31, %p32
      %p34 = scmp.ne.s32.totalorder %s24, %s27
      %p35 = scmp.eq.s32.totalorder %s20, 7
      %p36 = por %p34, %p35
      %p38 = scmp.ne.s32.totalorder %s27, %s37
      %p39 = scmp.eq.s32.totalorder %s20, 0
      %p40 = por %p38, %p39
      %p41 = scmp.lt.s32.totalorder %s15, 8
      // Predicated region
      $region9: #{tpu_custom_call.1} parent=5 // pred_check
        %p42 = pneg %p41
      $region10: #{tpu_custom_call.1} parent=5 // pred_check_branch
        %44 = sbr.rel (%p42) target = $region12
      $region11: #{tpu_custom_call.1} parent=5 // pred_region
        %p45 = pneg %p33
        %p46 = pneg %p30
        %s47 = sand.u32 %s24, 1
        %s48 = scalar_lea.sflag [#allocation7], %s47
        %s49 = sand.u32 %s24, 1
        %s50 = smul.addr %s49, 64
        %s51 = scalar_lea.vmem [#allocation6], %s50
        %s52 = smul.u32 4, %s15
        %s53 = smul.u32 %s15, 32
        %s54 = sld [smem:[#allocation5 + %s53]]
        %s55 = sshrl.u32 %s54, 3
        %s56 = sand.u32 %s54, 7
        %s57 = smul.u32 %s55, 16
        %s58 = sadd.s32 %s56, %s57
        %s59 = smul.addr %s58, 16
        %s60 = scalar_lea.hbm %s1, %s59
        %s62 = sshll.u32 [#allocation2], 4
        %s63 = int_to_ptr.vmem [resolvable:$true] %s62
        %65 = dma.hbm_to_vmem [thread:$0]  %s60, 32, %s63, [#allocation3], 128, 128, 1
        %s66 = sadd.s32 %s53, 1
        %s67 = sld [smem:[#allocation5 + %s66]]
        %s68 = sshrl.u32 %s67, 3
        %s69 = sand.u32 %s67, 7
        %s70 = smul.u32 %s68, 16
        %s71 = sadd.s32 %s69, %s70
        %s72 = smul.addr %s71, 16
        %s73 = scalar_lea.hbm %s1, %s72
        %s74 = scalar_lea.vmem [#allocation2], 1
        %s75 = scalar_lea.sflag [#allocation3], 1
        %s77 = sshll.u32 %s74, 4
        %s78 = int_to_ptr.vmem [resolvable:$true] %s77
        %80 = dma.hbm_to_vmem [thread:$0]  %s73, 32, %s78, %s75, 128, 128, 1
        %s81 = sadd.s32 %s53, 2
        %s82 = sld [smem:[#allocation5 + %s81]]
        %s83 = sshrl.u32 %s82, 3
        %s84 = sand.u32 %s82, 7
        %s85 = smul.u32 %s83, 16
        %s86 = sadd.s32 %s84, %s85
        %s87 = smul.addr %s86, 16
        %s88 = scalar_lea.hbm %s1, %s87
        %s89 = scalar_lea.vmem [#allocation2], 2
        %s90 = scalar_lea.sflag [#allocation3], 2
        %s92 = sshll.u32 %s89, 4
        %s93 = int_to_ptr.vmem [resolvable:$true] %s92
        %95 = dma.hbm_to_vmem [thread:$0]  %s88, 32, %s93, %s90, 128, 128, 1
        %s96 = sadd.s32 %s53, 3
        %s97 = sld [smem:[#allocation5 + %s96]]
        %s98 = sshrl.u32 %s97, 3
        %s99 = sand.u32 %s97, 7
        %s100 = smul.u32 %s98, 16
        %s101 = sadd.s32 %s99, %s100
        %s102 = smul.addr %s101, 16
        %s103 = scalar_lea.hbm %s1, %s102
        %s104 = scalar_lea.vmem [#allocation2], 3
        %s105 = scalar_lea.sflag [#allocation3], 3
        %s107 = sshll.u32 %s104, 4
        %s108 = int_to_ptr.vmem [resolvable:$true] %s107
        %110 = dma.hbm_to_vmem [thread:$0]  %s103, 32, %s108, %s105, 128, 128, 1
        %s111 = sadd.s32 %s53, 4
        %s112 = sld [smem:[#allocation5 + %s111]]
        %s113 = sshrl.u32 %s112, 3
        %s114 = sand.u32 %s112, 7
        %s115 = smul.u32 %s113, 16
        %s116 = sadd.s32 %s114, %s115
        %s117 = smul.addr %s116, 16
        %s118 = scalar_lea.hbm %s1, %s117
        %s119 = scalar_lea.vmem [#allocation2], 4
        %s120 = scalar_lea.sflag [#allocation3], 4
        %s122 = sshll.u32 %s119, 4
        %s123 = int_to_ptr.vmem [resolvable:$true] %s122
        %125 = dma.hbm_to_vmem [thread:$0]  %s118, 32, %s123, %s120, 128, 128, 1
        %s126 = sadd.s32 %s53, 5
        %s127 = sld [smem:[#allocation5 + %s126]]
        %s128 = sshrl.u32 %s127, 3
        %s129 = sand.u32 %s127, 7
        %s130 = smul.u32 %s128, 16
        %s131 = sadd.s32 %s129, %s130
        %s132 = smul.addr %s131, 16
        %s133 = scalar_lea.hbm %s1, %s132
        %s134 = scalar_lea.vmem [#allocation2], 5
        %s135 = scalar_lea.sflag [#allocation3], 5
        %s137 = sshll.u32 %s134, 4
        %s138 = int_to_ptr.vmem [resolvable:$true] %s137
        %140 = dma.hbm_to_vmem [thread:$0]  %s133, 32, %s138, %s135, 128, 128, 1
        %s141 = sadd.s32 %s53, 6
        %s142 = sld [smem:[#allocation5 + %s141]]
        %s143 = sshrl.u32 %s142, 3
        %s144 = sand.u32 %s142, 7
        %s145 = smul.u32 %s143, 16
        %s146 = sadd.s32 %s144, %s145
        %s147 = smul.addr %s146, 16
        %s148 = scalar_lea.hbm %s1, %s147
        %s149 = scalar_lea.vmem [#allocation2], 6
        %s150 = scalar_lea.sflag [#allocation3], 6
        %s152 = sshll.u32 %s149, 4
        %s153 = int_to_ptr.vmem [resolvable:$true] %s152
        %155 = dma.hbm_to_vmem [thread:$0]  %s148, 32, %s153, %s150, 128, 128, 1
        %s156 = sadd.s32 %s53, 7
        %s157 = sld [smem:[#allocation5 + %s156]]
        %s158 = sshrl.u32 %s157, 3
        %s159 = sand.u32 %s157, 7
        %s160 = smul.u32 %s158, 16
        %s161 = sadd.s32 %s159, %s160
        %s162 = smul.addr %s161, 16
        %s163 = scalar_lea.hbm %s1, %s162
        %s164 = scalar_lea.vmem [#allocation2], 7
        %s165 = scalar_lea.sflag [#allocation3], 7
        %s167 = sshll.u32 %s164, 4
        %s168 = int_to_ptr.vmem [resolvable:$true] %s167
        %170 = dma.hbm_to_vmem [thread:$0]  %s163, 32, %s168, %s165, 128, 128, 1
        %s171 = sadd.s32 %s53, 8
        %s172 = sld [smem:[#allocation5 + %s171]]
        %s173 = sshrl.u32 %s172, 3
        %s174 = sand.u32 %s172, 7
        %s175 = smul.u32 %s173, 16
        %s176 = sadd.s32 %s174, %s175
        %s177 = smul.addr %s176, 16
        %s178 = scalar_lea.hbm %s1, %s177
        %s179 = scalar_lea.vmem [#allocation2], 16
        %s180 = scalar_lea.sflag [#allocation3], 8
        %s182 = sshll.u32 %s179, 4
        %s183 = int_to_ptr.vmem [resolvable:$true] %s182
        %185 = dma.hbm_to_vmem [thread:$0]  %s178, 32, %s183, %s180, 128, 128, 1
        %s186 = sadd.s32 %s53, 9
        %s187 = sld [smem:[#allocation5 + %s186]]
        %s188 = sshrl.u32 %s187, 3
        %s189 = sand.u32 %s187, 7
        %s190 = smul.u32 %s188, 16
        %s191 = sadd.s32 %s189, %s190
        %s192 = smul.addr %s191, 16
        %s193 = scalar_lea.hbm %s1, %s192
        %s194 = scalar_lea.vmem [#allocation2], 17
        %s195 = scalar_lea.sflag [#allocation3], 9
        %s197 = sshll.u32 %s194, 4
        %s198 = int_to_ptr.vmem [resolvable:$true] %s197
        %200 = dma.hbm_to_vmem [thread:$0]  %s193, 32, %s198, %s195, 128, 128, 1
        %s201 = sadd.s32 %s53, 10
        %s202 = sld [smem:[#allocation5 + %s201]]
        %s203 = sshrl.u32 %s202, 3
        %s204 = sand.u32 %s202, 7
        %s205 = smul.u32 %s203, 16
        %s206 = sadd.s32 %s204, %s205
        %s207 = smul.addr %s206, 16
        %s208 = scalar_lea.hbm %s1, %s207
        %s209 = scalar_lea.vmem [#allocation2], 18
        %s210 = scalar_lea.sflag [#allocation3], 10
        %s212 = sshll.u32 %s209, 4
        %s213 = int_to_ptr.vmem [resolvable:$true] %s212
        %215 = dma.hbm_to_vmem [thread:$0]  %s208, 32, %s213, %s210, 128, 128, 1
        %s216 = sadd.s32 %s53, 11
        %s217 = sld [smem:[#allocation5 + %s216]]
        %s218 = sshrl.u32 %s217, 3
        %s219 = sand.u32 %s217, 7
        %s220 = smul.u32 %s218, 16
        %s221 = sadd.s32 %s219, %s220
        %s222 = smul.addr %s221, 16
        %s223 = scalar_lea.hbm %s1, %s222
        %s224 = scalar_lea.vmem [#allocation2], 19
        %s225 = scalar_lea.sflag [#allocation3], 11
        %s227 = sshll.u32 %s224, 4
        %s228 = int_to_ptr.vmem [resolvable:$true] %s227
        %230 = dma.hbm_to_vmem [thread:$0]  %s223, 32, %s228, %s225, 128, 128, 1
        %s231 = sadd.s32 %s53, 12
        %s232 = sld [smem:[#allocation5 + %s231]]
        %s233 = sshrl.u32 %s232, 3
        %s234 = sand.u32 %s232, 7
        %s235 = smul.u32 %s233, 16
        %s236 = sadd.s32 %s234, %s235
        %s237 = smul.addr %s236, 16
        %s238 = scalar_lea.hbm %s1, %s237
        %s239 = scalar_lea.vmem [#allocation2], 20
        %s240 = scalar_lea.sflag [#allocation3], 12
        %s242 = sshll.u32 %s239, 4
        %s243 = int_to_ptr.vmem [resolvable:$true] %s242
        %245 = dma.hbm_to_vmem [thread:$0]  %s238, 32, %s243, %s240, 128, 128, 1
        %s246 = sadd.s32 %s53, 13
        %s247 = sld [smem:[#allocation5 + %s246]]
        %s248 = sshrl.u32 %s247, 3
        %s249 = sand.u32 %s247, 7
        %s250 = smul.u32 %s248, 16
        %s251 = sadd.s32 %s249, %s250
        %s252 = smul.addr %s251, 16
        %s253 = scalar_lea.hbm %s1, %s252
        %s254 = scalar_lea.vmem [#allocation2], 21
        %s255 = scalar_lea.sflag [#allocation3], 13
        %s257 = sshll.u32 %s254, 4
        %s258 = int_to_ptr.vmem [resolvable:$true] %s257
        %260 = dma.hbm_to_vmem [thread:$0]  %s253, 32, %s258, %s255, 128, 128, 1
        %s261 = sadd.s32 %s53, 14
        %s262 = sld [smem:[#allocation5 + %s261]]
        %s263 = sshrl.u32 %s262, 3
        %s264 = sand.u32 %s262, 7
        %s265 = smul.u32 %s263, 16
        %s266 = sadd.s32 %s264, %s265
        %s267 = smul.addr %s266, 16
        %s268 = scalar_lea.hbm %s1, %s267
        %s269 = scalar_lea.vmem [#allocation2], 22
        %s270 = scalar_lea.sflag [#allocation3], 14
        %s272 = sshll.u32 %s269, 4
        %s273 = int_to_ptr.vmem [resolvable:$true] %s272
        %275 = dma.hbm_to_vmem [thread:$0]  %s268, 32, %s273, %s270, 128, 128, 1
        %s276 = sadd.s32 %s53, 15
        %s277 = sld [smem:[#allocation5 + %s276]]
        %s278 = sshrl.u32 %s277, 3
        %s279 = sand.u32 %s277, 7
        %s280 = smul.u32 %s278, 16
        %s281 = sadd.s32 %s279, %s280
        %s282 = smul.addr %s281, 16
        %s283 = scalar_lea.hbm %s1, %s282
        %s284 = scalar_lea.vmem [#allocation2], 23
        %s285 = scalar_lea.sflag [#allocation3], 15
        %s287 = sshll.u32 %s284, 4
        %s288 = int_to_ptr.vmem [resolvable:$true] %s287
        %290 = dma.hbm_to_vmem [thread:$0]  %s283, 32, %s288, %s285, 128, 128, 1
        %s291 = sadd.s32 %s53, 16
        %s292 = sld [smem:[#allocation5 + %s291]]
        %s293 = sshrl.u32 %s292, 3
        %s294 = sand.u32 %s292, 7
        %s295 = smul.u32 %s293, 16
        %s296 = sadd.s32 %s294, %s295
        %s297 = smul.addr %s296, 16
        %s298 = scalar_lea.hbm %s1, %s297
        %s299 = scalar_lea.vmem [#allocation2], 32
        %s300 = scalar_lea.sflag [#allocation3], 16
        %s302 = sshll.u32 %s299, 4
        %s303 = int_to_ptr.vmem [resolvable:$true] %s302
        %305 = dma.hbm_to_vmem [thread:$0]  %s298, 32, %s303, %s300, 128, 128, 1
        %s306 = sadd.s32 %s53, 17
        %s307 = sld [smem:[#allocation5 + %s306]]
        %s308 = sshrl.u32 %s307, 3
        %s309 = sand.u32 %s307, 7
        %s310 = smul.u32 %s308, 16
        %s311 = sadd.s32 %s309, %s310
        %s312 = smul.addr %s311, 16
        %s313 = scalar_lea.hbm %s1, %s312
        %s314 = scalar_lea.vmem [#allocation2], 33
        %s315 = scalar_lea.sflag [#allocation3], 17
        %s317 = sshll.u32 %s314, 4
        %s318 = int_to_ptr.vmem [resolvable:$true] %s317
        %320 = dma.hbm_to_vmem [thread:$0]  %s313, 32, %s318, %s315, 128, 128, 1
        %s321 = sadd.s32 %s53, 18
        %s322 = sld [smem:[#allocation5 + %s321]]
        %s323 = sshrl.u32 %s322, 3
        %s324 = sand.u32 %s322, 7
        %s325 = smul.u32 %s323, 16
        %s326 = sadd.s32 %s324, %s325
        %s327 = smul.addr %s326, 16
        %s328 = scalar_lea.hbm %s1, %s327
        %s329 = scalar_lea.vmem [#allocation2], 34
        %s330 = scalar_lea.sflag [#allocation3], 18
        %s332 = sshll.u32 %s329, 4
        %s333 = int_to_ptr.vmem [resolvable:$true] %s332
        %335 = dma.hbm_to_vmem [thread:$0]  %s328, 32, %s333, %s330, 128, 128, 1
        %s336 = sadd.s32 %s53, 19
        %s337 = sld [smem:[#allocation5 + %s336]]
        %s338 = sshrl.u32 %s337, 3
        %s339 = sand.u32 %s337, 7
        %s340 = smul.u32 %s338, 16
        %s341 = sadd.s32 %s339, %s340
        %s342 = smul.addr %s341, 16
        %s343 = scalar_lea.hbm %s1, %s342
        %s344 = scalar_lea.vmem [#allocation2], 35
        %s345 = scalar_lea.sflag [#allocation3], 19
        %s347 = sshll.u32 %s344, 4
        %s348 = int_to_ptr.vmem [resolvable:$true] %s347
        %350 = dma.hbm_to_vmem [thread:$0]  %s343, 32, %s348, %s345, 128, 128, 1
        %s351 = sadd.s32 %s53, 20
        %s352 = sld [smem:[#allocation5 + %s351]]
        %s353 = sshrl.u32 %s352, 3
        %s354 = sand.u32 %s352, 7
        %s355 = smul.u32 %s353, 16
        %s356 = sadd.s32 %s354, %s355
        %s357 = smul.addr %s356, 16
        %s358 = scalar_lea.hbm %s1, %s357
        %s359 = scalar_lea.vmem [#allocation2], 36
        %s360 = scalar_lea.sflag [#allocation3], 20
        %s362 = sshll.u32 %s359, 4
        %s363 = int_to_ptr.vmem [resolvable:$true] %s362
        %365 = dma.hbm_to_vmem [thread:$0]  %s358, 32, %s363, %s360, 128, 128, 1
        %s366 = sadd.s32 %s53, 21
        %s367 = sld [smem:[#allocation5 + %s366]]
        %s368 = sshrl.u32 %s367, 3
        %s369 = sand.u32 %s367, 7
        %s370 = smul.u32 %s368, 16
        %s371 = sadd.s32 %s369, %s370
        %s372 = smul.addr %s371, 16
        %s373 = scalar_lea.hbm %s1, %s372
        %s374 = scalar_lea.vmem [#allocation2], 37
        %s375 = scalar_lea.sflag [#allocation3], 21
        %s377 = sshll.u32 %s374, 4
        %s378 = int_to_ptr.vmem [resolvable:$true] %s377
        %380 = dma.hbm_to_vmem [thread:$0]  %s373, 32, %s378, %s375, 128, 128, 1
        %s381 = sadd.s32 %s53, 22
        %s382 = sld [smem:[#allocation5 + %s381]]
        %s383 = sshrl.u32 %s382, 3
        %s384 = sand.u32 %s382, 7
        %s385 = smul.u32 %s383, 16
        %s386 = sadd.s32 %s384, %s385
        %s387 = smul.addr %s386, 16
        %s388 = scalar_lea.hbm %s1, %s387
        %s389 = scalar_lea.vmem [#allocation2], 38
        %s390 = scalar_lea.sflag [#allocation3], 22
        %s392 = sshll.u32 %s389, 4
        %s393 = int_to_ptr.vmem [resolvable:$true] %s392
        %395 = dma.hbm_to_vmem [thread:$0]  %s388, 32, %s393, %s390, 128, 128, 1
        %s396 = sadd.s32 %s53, 23
        %s397 = sld [smem:[#allocation5 + %s396]]
        %s398 = sshrl.u32 %s397, 3
        %s399 = sand.u32 %s397, 7
        %s400 = smul.u32 %s398, 16
        %s401 = sadd.s32 %s399, %s400
        %s402 = smul.addr %s401, 16
        %s403 = scalar_lea.hbm %s1, %s402
        %s404 = scalar_lea.vmem [#allocation2], 39
        %s405 = scalar_lea.sflag [#allocation3], 23
        %s407 = sshll.u32 %s404, 4
        %s408 = int_to_ptr.vmem [resolvable:$true] %s407
        %410 = dma.hbm_to_vmem [thread:$0]  %s403, 32, %s408, %s405, 128, 128, 1
        %s411 = sadd.s32 %s53, 24
        %s412 = sld [smem:[#allocation5 + %s411]]
        %s413 = sshrl.u32 %s412, 3
        %s414 = sand.u32 %s412, 7
        %s415 = smul.u32 %s413, 16
        %s416 = sadd.s32 %s414, %s415
        %s417 = smul.addr %s416, 16
        %s418 = scalar_lea.hbm %s1, %s417
        %s419 = scalar_lea.vmem [#allocation2], 48
        %s420 = scalar_lea.sflag [#allocation3], 24
        %s422 = sshll.u32 %s419, 4
        %s423 = int_to_ptr.vmem [resolvable:$true] %s422
        %425 = dma.hbm_to_vmem [thread:$0]  %s418, 32, %s423, %s420, 128, 128, 1
        %s426 = sadd.s32 %s53, 25
        %s427 = sld [smem:[#allocation5 + %s426]]
        %s428 = sshrl.u32 %s427, 3
        %s429 = sand.u32 %s427, 7
        %s430 = smul.u32 %s428, 16
        %s431 = sadd.s32 %s429, %s430
        %s432 = smul.addr %s431, 16
        %s433 = scalar_lea.hbm %s1, %s432
        %s434 = scalar_lea.vmem [#allocation2], 49
        %s435 = scalar_lea.sflag [#allocation3], 25
        %s437 = sshll.u32 %s434, 4
        %s438 = int_to_ptr.vmem [resolvable:$true] %s437
        %440 = dma.hbm_to_vmem [thread:$0]  %s433, 32, %s438, %s435, 128, 128, 1
        %s441 = sadd.s32 %s53, 26
        %s442 = sld [smem:[#allocation5 + %s441]]
        %s443 = sshrl.u32 %s442, 3
        %s444 = sand.u32 %s442, 7
        %s445 = smul.u32 %s443, 16
        %s446 = sadd.s32 %s444, %s445
        %s447 = smul.addr %s446, 16
        %s448 = scalar_lea.hbm %s1, %s447
        %s449 = scalar_lea.vmem [#allocation2], 50
        %s450 = scalar_lea.sflag [#allocation3], 26
        %s452 = sshll.u32 %s449, 4
        %s453 = int_to_ptr.vmem [resolvable:$true] %s452
        %455 = dma.hbm_to_vmem [thread:$0]  %s448, 32, %s453, %s450, 128, 128, 1
        %s456 = sadd.s32 %s53, 27
        %s457 = sld [smem:[#allocation5 + %s456]]
        %s458 = sshrl.u32 %s457, 3
        %s459 = sand.u32 %s457, 7
        %s460 = smul.u32 %s458, 16
        %s461 = sadd.s32 %s459, %s460
        %s462 = smul.addr %s461, 16
        %s463 = scalar_lea.hbm %s1, %s462
        %s464 = scalar_lea.vmem [#allocation2], 51
        %s465 = scalar_lea.sflag [#allocation3], 27
        %s467 = sshll.u32 %s464, 4
        %s468 = int_to_ptr.vmem [resolvable:$true] %s467
        %470 = dma.hbm_to_vmem [thread:$0]  %s463, 32, %s468, %s465, 128, 128, 1
        %s471 = sadd.s32 %s53, 28
        %s472 = sld [smem:[#allocation5 + %s471]]
        %s473 = sshrl.u32 %s472, 3
        %s474 = sand.u32 %s472, 7
        %s475 = smul.u32 %s473, 16
        %s476 = sadd.s32 %s474, %s475
        %s477 = smul.addr %s476, 16
        %s478 = scalar_lea.hbm %s1, %s477
        %s479 = scalar_lea.vmem [#allocation2], 52
        %s480 = scalar_lea.sflag [#allocation3], 28
        %s482 = sshll.u32 %s479, 4
        %s483 = int_to_ptr.vmem [resolvable:$true] %s482
        %485 = dma.hbm_to_vmem [thread:$0]  %s478, 32, %s483, %s480, 128, 128, 1
        %s486 = sadd.s32 %s53, 29
        %s487 = sld [smem:[#allocation5 + %s486]]
        %s488 = sshrl.u32 %s487, 3
        %s489 = sand.u32 %s487, 7
        %s490 = smul.u32 %s488, 16
        %s491 = sadd.s32 %s489, %s490
        %s492 = smul.addr %s491, 16
        %s493 = scalar_lea.hbm %s1, %s492
        %s494 = scalar_lea.vmem [#allocation2], 53
        %s495 = scalar_lea.sflag [#allocation3], 29
        %s497 = sshll.u32 %s494, 4
        %s498 = int_to_ptr.vmem [resolvable:$true] %s497
        %500 = dma.hbm_to_vmem [thread:$0]  %s493, 32, %s498, %s495, 128, 128, 1
        %s501 = sadd.s32 %s53, 30
        %s502 = sld [smem:[#allocation5 + %s501]]
        %s503 = sshrl.u32 %s502, 3
        %s504 = sand.u32 %s502, 7
        %s505 = smul.u32 %s503, 16
        %s506 = sadd.s32 %s504, %s505
        %s507 = smul.addr %s506, 16
        %s508 = scalar_lea.hbm %s1, %s507
        %s509 = scalar_lea.vmem [#allocation2], 54
        %s510 = scalar_lea.sflag [#allocation3], 30
        %s512 = sshll.u32 %s509, 4
        %s513 = int_to_ptr.vmem [resolvable:$true] %s512
        %515 = dma.hbm_to_vmem [thread:$0]  %s508, 32, %s513, %s510, 128, 128, 1
        %s516 = sadd.s32 %s53, 31
        %s517 = sld [smem:[#allocation5 + %s516]]
        %s518 = sshrl.u32 %s517, 3
        %s519 = sand.u32 %s517, 7
        %s520 = smul.u32 %s518, 16
        %s521 = sadd.s32 %s519, %s520
        %s522 = smul.addr %s521, 16
        %s523 = scalar_lea.hbm %s1, %s522
        %s524 = scalar_lea.vmem [#allocation2], 55
        %s525 = scalar_lea.sflag [#allocation3], 31
        %s527 = sshll.u32 %s524, 4
        %s528 = int_to_ptr.vmem [resolvable:$true] %s527
        %530 = dma.hbm_to_vmem [thread:$0]  %s523, 32, %s528, %s525, 128, 128, 1
        %s531 = sld [smem:[#allocation5 + %s53]]
        %s532 = smul.u32 1, 2
        %s533 = sshll.u32 %s532, 4
        %534 = dma.done [#allocation3], %s533
        %s535 = sld [smem:[#allocation5 + %s66]]
        %s536 = sshll.u32 %s532, 4
        %537 = dma.done %s75, %s536
        %s538 = sld [smem:[#allocation5 + %s81]]
        %s539 = sshll.u32 %s532, 4
        %540 = dma.done %s90, %s539
        %s541 = sld [smem:[#allocation5 + %s96]]
        %s542 = sshll.u32 %s532, 4
        %543 = dma.done %s105, %s542
        %s544 = sld [smem:[#allocation5 + %s111]]
        %s545 = sshll.u32 %s532, 4
        %546 = dma.done %s120, %s545
        %s547 = sld [smem:[#allocation5 + %s126]]
        %s548 = sshll.u32 %s532, 4
        %549 = dma.done %s135, %s548
        %s550 = sld [smem:[#allocation5 + %s141]]
        %s551 = sshll.u32 %s532, 4
        %552 = dma.done %s150, %s551
        %s553 = sld [smem:[#allocation5 + %s156]]
        %s554 = sshll.u32 %s532, 4
        %555 = dma.done %s165, %s554
        %s556 = sld [smem:[#allocation5 + %s171]]
        %s557 = sshll.u32 %s532, 4
        %558 = dma.done %s180, %s557
        %s559 = sld [smem:[#allocation5 + %s186]]
        %s560 = sshll.u32 %s532, 4
        %561 = dma.done %s195, %s560
        %s562 = sld [smem:[#allocation5 + %s201]]
        %s563 = sshll.u32 %s532, 4
        %564 = dma.done %s210, %s563
        %s565 = sld [smem:[#allocation5 + %s216]]
        %s566 = sshll.u32 %s532, 4
        %567 = dma.done %s225, %s566
        %s568 = sld [smem:[#allocation5 + %s231]]
        %s569 = sshll.u32 %s532, 4
        %570 = dma.done %s240, %s569
        %s571 = sld [smem:[#allocation5 + %s246]]
        %s572 = sshll.u32 %s532, 4
        %573 = dma.done %s255, %s572
        %s574 = sld [smem:[#allocation5 + %s261]]
        %s575 = sshll.u32 %s532, 4
        %576 = dma.done %s270, %s575
        %s577 = sld [smem:[#allocation5 + %s276]]
        %s578 = sshll.u32 %s532, 4
        %579 = dma.done %s285, %s578
        %s580 = sld [smem:[#allocation5 + %s291]]
        %s581 = sshll.u32 %s532, 4
        %582 = dma.done %s300, %s581
        %s583 = sld [smem:[#allocation5 + %s306]]
        %s584 = sshll.u32 %s532, 4
        %585 = dma.done %s315, %s584
        %s586 = sld [smem:[#allocation5 + %s321]]
        %s587 = sshll.u32 %s532, 4
        %588 = dma.done %s330, %s587
        %s589 = sld [smem:[#allocation5 + %s336]]
        %s590 = sshll.u32 %s532, 4
        %591 = dma.done %s345, %s590
        %s592 = sld [smem:[#allocation5 + %s351]]
        %s593 = sshll.u32 %s532, 4
        %594 = dma.done %s360, %s593
        %s595 = sld [smem:[#allocation5 + %s366]]
        %s596 = sshll.u32 %s532, 4
        %597 = dma.done %s375, %s596
        %s598 = sld [smem:[#allocation5 + %s381]]
        %s599 = sshll.u32 %s532, 4
        %600 = dma.done %s390, %s599
        %s601 = sld [smem:[#allocation5 + %s396]]
        %s602 = sshll.u32 %s532, 4
        %603 = dma.done %s405, %s602
        %s604 = sld [smem:[#allocation5 + %s411]]
        %s605 = sshll.u32 %s532, 4
        %606 = dma.done %s420, %s605
        %s607 = sld [smem:[#allocation5 + %s426]]
        %s608 = sshll.u32 %s532, 4
        %609 = dma.done %s435, %s608
        %s610 = sld [smem:[#allocation5 + %s441]]
        %s611 = sshll.u32 %s532, 4
        %612 = dma.done %s450, %s611
        %s613 = sld [smem:[#allocation5 + %s456]]
        %s614 = sshll.u32 %s532, 4
        %615 = dma.done %s465, %s614
        %s616 = sld [smem:[#allocation5 + %s471]]
        %s617 = sshll.u32 %s532, 4
        %618 = dma.done %s480, %s617
        %s619 = sld [smem:[#allocation5 + %s486]]
        %s620 = sshll.u32 %s532, 4
        %621 = dma.done %s495, %s620
        %s622 = sld [smem:[#allocation5 + %s501]]
        %s623 = sshll.u32 %s532, 4
        %624 = dma.done %s510, %s623
        %s625 = sld [smem:[#allocation5 + %s516]]
        %s626 = sshll.u32 %s532, 4
        %627 = dma.done %s525, %s626
        %v628 = vld [vmem:[#allocation2] sm:$0xff]
        %v629 = vld [vmem:[#allocation2 + $0x8] sm:$0xff]
        %v630 = vld [vmem:[#allocation2 + $0x10] sm:$0xff]
        %v631 = vld [vmem:[#allocation2 + $0x18] sm:$0xff]
        %v632 = vld [vmem:[#allocation2 + $0x20] sm:$0xff]
        %v633 = vld [vmem:[#allocation2 + $0x28] sm:$0xff]
        %v634 = vld [vmem:[#allocation2 + $0x30] sm:$0xff]
        %v635 = vld [vmem:[#allocation2 + $0x38] sm:$0xff]
        %v636 = vmul.f32 %v628, 16.0
        %v637 = vmul.f32 %v629, 16.0
        %v638 = vmul.f32 %v630, 16.0
        %v639 = vmul.f32 %v631, 16.0
        %v640 = vmul.f32 %v632, 16.0
        %v641 = vmul.f32 %v633, 16.0
        %v642 = vmul.f32 %v634, 16.0
        %v643 = vmul.f32 %v635, 16.0
        %644 = vst [vmem:[%s51] sm:$0xff] %v636
        %645 = vst [vmem:[%s51 + $0x8] sm:$0xff] %v637
        %646 = vst [vmem:[%s51 + $0x10] sm:$0xff] %v638
        %647 = vst [vmem:[%s51 + $0x18] sm:$0xff] %v639
        %648 = vst [vmem:[%s51 + $0x20] sm:$0xff] %v640
        %649 = vst [vmem:[%s51 + $0x28] sm:$0xff] %v641
        %650 = vst [vmem:[%s51 + $0x30] sm:$0xff] %v642
        %651 = vst [vmem:[%s51 + $0x38] sm:$0xff] %v643
        %s652 = sand.u32 %s24, 1
        %s653 = scalar_lea.sflag [#allocation7], %s652
        %s654 = sand.u32 %s24, 1
        %s655 = smul.addr %s654, 64
        %s656 = scalar_lea.vmem [#allocation6], %s655
        // Predicated region
        $region13: #{tpu_custom_call.1} parent=11 // pred_check
          %p657 = pneg %p30
        $region14: #{tpu_custom_call.1} parent=11 // pred_check_branch
          %659 = sbr.rel (%p657) target = $region16
        $region15: #{tpu_custom_call.1} parent=11 // pred_region
          %s660 = smul.u32 4, %s15
          %s662 = ssub.s32 1024, 1024
          %663 = vsyncadd %s653, %s662
          %s664 = smul.addr %s660, 2
          %s665 = smul.addr %s664, 128
          %s666 = scalar_lea.hbm %s2, %s665
          %s667 = sshll.u32 %s656, 4
          %s668 = int_to_ptr.vmem [resolvable:$true] %s667
          %673 = dma.vmem_to_hbm [thread:$0]  %s668, 1024, %s666, %s653, 256, 256, 16
        $region16: #{tpu_custom_call.1} parent=11 // pred_fallthru
          _
      $region12: #{tpu_custom_call.1} parent=5 // pred_fallthru
        _
      %p674 = scmp.le.s32.totalorder 1, %s15
      // Predicated region
      $region17: #{tpu_custom_call.1} parent=5 // pred_check
        %p675 = pneg %p674
      $region18: #{tpu_custom_call.1} parent=5 // pred_check_branch
        %677 = sbr.rel (%p675) target = $region20
      $region19: #{tpu_custom_call.1} parent=5 // pred_region
        %s678 = ssub.s32 %s15, 1
        // Predicated region
        $region21: #{tpu_custom_call.1} parent=19 // pred_check
          %p679 = pneg %p36
        $region22: #{tpu_custom_call.1} parent=19 // pred_check_branch
          %681 = sbr.rel (%p679) target = $region24
        $region23: #{tpu_custom_call.1} parent=19 // pred_region
          %s682 = sand.u32 %s27, 1
          %s683 = scalar_lea.sflag [#allocation7], %s682
          %s684 = sand.u32 %s27, 1
          %s685 = smul.addr %s684, 64
          %s686 = scalar_lea.vmem [#allocation6], %s685
          %687 = dma.done %s683, 1024
        $region24: #{tpu_custom_call.1} parent=19 // pred_fallthru
          _
      $region20: #{tpu_custom_call.1} parent=5 // pred_fallthru
        _
    $region6: #{tpu_custom_call.1} parent=1 // loop_footer
      %s19 = sadd.s32 1, %s15
    $region7: #{tpu_custom_call.1} parent=1 // loop_footer_branch
      %14 = sbr.rel target = $region3
    $region8: #{tpu_custom_call.1} parent=1 // loop_exit
      _
    %688 = vsyncpa [#allocation7], 1
    %s689 = scalar_lea.sflag [#allocation7], 1
    %690 = vsyncpa %s689, 1
  %691 = vsyncmov [#allocation3]
  %s692 = vpop.sfrf %691
  %p693 = scmp.eq.s32.totalorder %s692, 0
  %p694 = pneg %p693
  %696 = shalt.err (%p694)
  %s697 = scalar_lea.sflag [#allocation3], 1
  %698 = vsyncmov %s697
  %s699 = vpop.sfrf %698
  %p700 = scmp.eq.s32.totalorder %s699, 0
  %p701 = pneg %p700
  %703 = shalt.err (%p701)
  %s704 = scalar_lea.sflag [#allocation3], 2
  %705 = vsyncmov %s704
  %s706 = vpop.sfrf %705
  %p707 = scmp.eq.s32.totalorder %s706, 0
  %p708 = pneg %p707
  %710 = shalt.err (%p708)
  %s711 = scalar_lea.sflag [#allocation3], 3
  %712 = vsyncmov %s711
  %s713 = vpop.sfrf %712
  %p714 = scmp.eq.s32.totalorder %s713, 0
  %p715 = pneg %p714
  %717 = shalt.err (%p715)
  %s718 = scalar_lea.sflag [#allocation3], 4
  %719 = vsyncmov %s718
  %s720 = vpop.sfrf %719
  %p721 = scmp.eq.s32.totalorder %s720, 0
  %p722 = pneg %p721
  %724 = shalt.err (%p722)
  %s725 = scalar_lea.sflag [#allocation3], 5
  %726 = vsyncmov %s725
  %s727 = vpop.sfrf %726
  %p728 = scmp.eq.s32.totalorder %s727, 0
  %p729 = pneg %p728
  %731 = shalt.err (%p729)
  %s732 = scalar_lea.sflag [#allocation3], 6
  %733 = vsyncmov %s732
  %s734 = vpop.sfrf %733
  %p735 = scmp.eq.s32.totalorder %s734, 0
  %p736 = pneg %p735
  %738 = shalt.err (%p736)
  %s739 = scalar_lea.sflag [#allocation3], 7
  %740 = vsyncmov %s739
  %s741 = vpop.sfrf %740
  %p742 = scmp.eq.s32.totalorder %s741, 0
  %p743 = pneg %p742
  %745 = shalt.err (%p743)
  %s746 = scalar_lea.sflag [#allocation3], 8
  %747 = vsyncmov %s746
  %s748 = vpop.sfrf %747
  %p749 = scmp.eq.s32.totalorder %s748, 0
  %p750 = pneg %p749
  %752 = shalt.err (%p750)
  %s753 = scalar_lea.sflag [#allocation3], 9
  %754 = vsyncmov %s753
  %s755 = vpop.sfrf %754
  %p756 = scmp.eq.s32.totalorder %s755, 0
  %p757 = pneg %p756
  %759 = shalt.err (%p757)
  %s760 = scalar_lea.sflag [#allocation3], 10
  %761 = vsyncmov %s760
  %s762 = vpop.sfrf %761
  %p763 = scmp.eq.s32.totalorder %s762, 0
  %p764 = pneg %p763
  %766 = shalt.err (%p764)
  %s767 = scalar_lea.sflag [#allocation3], 11
  %768 = vsyncmov %s767
  %s769 = vpop.sfrf %768
  %p770 = scmp.eq.s32.totalorder %s769, 0
  %p771 = pneg %p770
  %773 = shalt.err (%p771)
  %s774 = scalar_lea.sflag [#allocation3], 12
  %775 = vsyncmov %s774
  %s776 = vpop.sfrf %775
  %p777 = scmp.eq.s32.totalorder %s776, 0
  %p778 = pneg %p777
  %780 = shalt.err (%p778)
  %s781 = scalar_lea.sflag [#allocation3], 13
  %782 = vsyncmov %s781
  %s783 = vpop.sfrf %782
  %p784 = scmp.eq.s32.totalorder %s783, 0
  %p785 = pneg %p784
  %787 = shalt.err (%p785)
  %s788 = scalar_lea.sflag [#allocation3], 14
  %789 = vsyncmov %s788
  %s790 = vpop.sfrf %789
  %p791 = scmp.eq.s32.totalorder %s790, 0
  %p792 = pneg %p791
  %794 = shalt.err (%p792)
  %s795 = scalar_lea.sflag [#allocation3], 15
  %796 = vsyncmov %s795
  %s797 = vpop.sfrf %796
  %p798 = scmp.eq.s32.totalorder %s797, 0
  %p799 = pneg %p798
  %801 = shalt.err (%p799)
  %s802 = scalar_lea.sflag [#allocation3], 16
  %803 = vsyncmov %s802
  %s804 = vpop.sfrf %803
  %p805 = scmp.eq.s32.totalorder %s804, 0
  %p806 = pneg %p805
  %808 = shalt.err (%p806)
  %s809 = scalar_lea.sflag [#allocation3], 17
  %810 = vsyncmov %s809
  %s811 = vpop.sfrf %810
  %p812 = scmp.eq.s32.totalorder %s811, 0
  %p813 = pneg %p812
  %815 = shalt.err (%p813)
  %s816 = scalar_lea.sflag [#allocation3], 18
  %817 = vsyncmov %s816
  %s818 = vpop.sfrf %817
  %p819 = scmp.eq.s32.totalorder %s818, 0
  %p820 = pneg %p819
  %822 = shalt.err (%p820)
  %s823 = scalar_lea.sflag [#allocation3], 19
  %824 = vsyncmov %s823
  %s825 = vpop.sfrf %824
  %p826 = scmp.eq.s32.totalorder %s825, 0
  %p827 = pneg %p826
  %829 = shalt.err (%p827)
  %s830 = scalar_lea.sflag [#allocation3], 20
  %831 = vsyncmov %s830
  %s832 = vpop.sfrf %831
  %p833 = scmp.eq.s32.totalorder %s832, 0
  %p834 = pneg %p833
  %836 = shalt.err (%p834)
  %s837 = scalar_lea.sflag [#allocation3], 21
  %838 = vsyncmov %s837
  %s839 = vpop.sfrf %838
  %p840 = scmp.eq.s32.totalorder %s839, 0
  %p841 = pneg %p840
  %843 = shalt.err (%p841)
  %s844 = scalar_lea.sflag [#allocation3], 22
  %845 = vsyncmov %s844
  %s846 = vpop.sfrf %845
  %p847 = scmp.eq.s32.totalorder %s846, 0
  %p848 = pneg %p847
  %850 = shalt.err (%p848)
  %s851 = scalar_lea.sflag [#allocation3], 23
  %852 = vsyncmov %s851
  %s853 = vpop.sfrf %852
  %p854 = scmp.eq.s32.totalorder %s853, 0
  %p855 = pneg %p854
  %857 = shalt.err (%p855)
  %s858 = scalar_lea.sflag [#allocation3], 24
  %859 = vsyncmov %s858
  %s860 = vpop.sfrf %859
  %p861 = scmp.eq.s32.totalorder %s860, 0
  %p862 = pneg %p861
  %864 = shalt.err (%p862)
  %s865 = scalar_lea.sflag [#allocation3], 25
  %866 = vsyncmov %s865
  %s867 = vpop.sfrf %866
  %p868 = scmp.eq.s32.totalorder %s867, 0
  %p869 = pneg %p868
  %871 = shalt.err (%p869)
  %s872 = scalar_lea.sflag [#allocation3], 26
  %873 = vsyncmov %s872
  %s874 = vpop.sfrf %873
  %p875 = scmp.eq.s32.totalorder %s874, 0
  %p876 = pneg %p875
  %878 = shalt.err (%p876)
  %s879 = scalar_lea.sflag [#allocation3], 27
  %880 = vsyncmov %s879
  %s881 = vpop.sfrf %880
  %p882 = scmp.eq.s32.totalorder %s881, 0
  %p883 = pneg %p882
  %885 = shalt.err (%p883)
  %s886 = scalar_lea.sflag [#allocation3], 28
  %887 = vsyncmov %s886
  %s888 = vpop.sfrf %887
  %p889 = scmp.eq.s32.totalorder %s888, 0
  %p890 = pneg %p889
  %892 = shalt.err (%p890)
  %s893 = scalar_lea.sflag [#allocation3], 29
  %894 = vsyncmov %s893
  %s895 = vpop.sfrf %894
  %p896 = scmp.eq.s32.totalorder %s895, 0
  %p897 = pneg %p896
  %899 = shalt.err (%p897)
  %s900 = scalar_lea.sflag [#allocation3], 30
  %901 = vsyncmov %s900
  %s902 = vpop.sfrf %901
  %p903 = scmp.eq.s32.totalorder %s902, 0
  %p904 = pneg %p903
  %906 = shalt.err (%p904)
  %s907 = scalar_lea.sflag [#allocation3], 31
  %908 = vsyncmov %s907
  %s909 = vpop.sfrf %908
  %p910 = scmp.eq.s32.totalorder %s909, 0
  %p911 = pneg %p910
  %913 = shalt.err (%p911)

</llo_original>
